<compile_context>
chip_gen: v7x
topology: tpu7x:2x2x1
jax: 0.10.0
libtpu: 0.0.40
codegen_flags: <defaults>
</compile_context>

<pallas_src>
import math

import numpy as np
import jax
import jax.numpy as jnp
from jax.experimental import pallas as pl
from jax.experimental.pallas import tpu as pltpu


def _round_up(n, m):
    return ((n + m - 1) // m) * m


def _choose_tile_h(N, Ho, Wo, row_budget=1024):
    """Largest divisor of Ho that keeps the tile small-ish and >= 4 grid steps."""
    cands = [t for t in range(1, Ho + 1) if Ho % t == 0]
    ok = [t for t in cands if t * Wo <= row_budget] or [min(cands)]
    par = [t for t in ok if N * (Ho // t) >= 4]     # >= 2 steps per TensorCore (v7x)
    return max(par) if par else max(ok)


# -----------------------------------------------------------------------------
# The fused kernel: conv1/bn1/relu/mask1 -> conv2/bn2/relu/mask2 -> conv3/bn3
#                   -> (+ downsample residual) -> relu -> mask3, one spatial tile.
# -----------------------------------------------------------------------------
def _make_kernel(geo):
    s, TH, Wo = geo['stride'], geo['tile_h'], geo['wo']
    RP, CP = geo['rp'], geo['cp_pad']
    HB, WB = geo['hb'], geo['wb']
    cin_p, cm_p, cout_p = geo['cin_p'], geo['cm_p'], geo['cout_p']
    has_down = geo['has_down']
    f32, bf16 = jnp.float32, jnp.bfloat16

    def kernel(*refs):
        if has_down:
            x_ref, w1_ref, w2_ref, s2_ref, w3d_ref, o_ref = refs
        else:
            x_ref, w1_ref, w2_ref, s2_ref, w3_ref, s3_ref, m3_ref, o_ref = refs

        # ---- conv1 (+bn1 +relu +mask1), ONCE for every input position of the tile.
        # The indicator channel of x carries shift1*mask1 via w1's extra row, and is 0
        # at zero-padding positions -> h1 == 0 exactly on the conv2 padding ring.
        x = x_ref[...]                                        # (HB, WB, cin_p) bf16
        h1 = jnp.maximum(
            jnp.dot(x.reshape(HB * WB, cin_p), w1_ref[...],
                    preferred_element_type=f32), 0.0)
        h1 = h1.astype(bf16).reshape(HB, WB, cm_p)            # resident in VMEM/vregs

        # ---- conv2 (3x3, stride s) as 9 static in-register slices of the resident h1.
        # Rows/cols are phase-regrouped so each (di, dj) operand is contiguous.
        acc = None
        for di in range(3):
            r0 = (di % s) * RP + (di // s)
            for dj in range(3):
                c0 = (dj % s) * CP + (dj // s)
                op = h1[r0:r0 + TH, c0:c0 + Wo, :].reshape(TH * Wo, cm_p)
                d = jnp.dot(op, w2_ref[di * 3 + dj], preferred_element_type=f32)
                acc = d if acc is None else acc + d
        h2 = jnp.maximum(acc + s2_ref[...], 0.0).astype(bf16)  # +bn2 shift, relu (mask2 folded)

        # center-of-window x values == x[s*io, s*jo, :] (residual / downsample input)
        rc = (1 % s) * RP + (1 // s)
        cc = (1 % s) * CP + (1 // s)
        xc = x[rc:rc + TH, cc:cc + Wo, :].reshape(TH * Wo, cin_p)

        if has_down:
            # conv3+bn3 and downsample(1x1,stride s)+bn merged into ONE deep-K dot;
            # both BN shifts ride on xc's indicator channel -> epilogue is just relu.
            lhs = jnp.concatenate([h2, xc], axis=1)            # (TH*Wo, cm_p+cin_p)
            out = jnp.dot(lhs, w3d_ref[...], preferred_element_type=f32)
            o_ref[...] = jnp.maximum(out, 0.0)                 # mask3 folded into w3d
        else:
            # identity residual: exact add (no eye matmul), mask3 applied after relu.
            out = (jnp.dot(h2, w3_ref[...], preferred_element_type=f32)
                   + s3_ref[...] + xc[:, :cout_p].astype(f32))
            o_ref[...] = jnp.maximum(out, 0.0) * m3_ref[...]

    return kernel


# -----------------------------------------------------------------------------
# Parameter preparation (once): fold BN + masks, pad channels to 128, pack, bf16.
# -----------------------------------------------------------------------------
def prepare_params(raw, stride, eps=1e-5):
    cm, cin = raw['conv1_w'].shape[:2]
    cout = raw['conv3_w'].shape[0]
    has_down = raw.get('down_w') is not None
    if not has_down:
        assert stride == 1 and cin == cout, \
            "identity residual requires stride == 1 and cin == cout"

    cin_p = _round_up(cin + 1, 128)     # +1: indicator channel (carries BN shifts)
    cm_p = _round_up(cm, 128)
    cout_p = _round_up(cout, 128)

    m1, m2, m3 = raw['mask1'], raw['mask2'], raw['mask3']
    assert bool(np.all(np.asarray(m1) >= 0)) and bool(np.all(np.asarray(m2) >= 0)) and \
        bool(np.all(np.asarray(m3) >= 0)), "mask-into-weight fold requires masks >= 0"

    def fold(w, bn):
        scale = bn['gamma'] / jnp.sqrt(bn['var'] + eps)
        shift = bn['beta'] - bn['mean'] * scale
        return w * scale[:, None, None, None], shift

    w1f, sh1 = fold(raw['conv1_w'], raw['bn1'])    # (cm, cin, 1, 1)
    w2f, sh2 = fold(raw['conv2_w'], raw['bn2'])    # (cm, cm, 3, 3)
    w3f, sh3 = fold(raw['conv3_w'], raw['bn3'])    # (cout, cm, 1, 1)

    # conv1 (+bn1 scale +mask1) -> (cin_p, cm_p); indicator row carries shift1*mask1.
    w1m = jnp.zeros((cin_p, cm_p), jnp.float32)
    w1m = w1m.at[:cin, :cm].set(jnp.transpose(w1f[:, :, 0, 0] * m1[:, None], (1, 0)))
    w1m = w1m.at[cin, :cm].set(sh1 * m1)

    # conv2 (+bn2 scale +mask2) -> (9, cm_p, cm_p) as (offset, in, out); shift separate.
    w2t = jnp.transpose(w2f * m2[:, None, None, None], (2, 3, 1, 0)).reshape(9, cm, cm)
    w2m = jnp.zeros((9, cm_p, cm_p), jnp.float32).at[:, :cm, :cm].set(w2t)
    s2v = jnp.zeros((1, cm_p), jnp.float32).at[0, :cm].set(sh2 * m2)

    packed = dict(w1=w1m.astype(jnp.bfloat16), w2=w2m.astype(jnp.bfloat16), s2=s2v)

    if has_down:
        wdf, shd = fold(raw['down_w'], raw['down_bn'])
        # stacked [conv3 ; downsample] weight (mask3 folded); indicator row = shifts*m3.
        w3d = jnp.zeros((cm_p + cin_p, cout_p), jnp.float32)
        w3d = w3d.at[:cm, :cout].set(
            jnp.transpose(w3f[:, :, 0, 0] * m3[:, None], (1, 0)))
        w3d = w3d.at[cm_p:cm_p + cin, :cout].set(
            jnp.transpose(wdf[:, :, 0, 0] * m3[:, None], (1, 0)))
        w3d = w3d.at[cm_p + cin, :cout].set((sh3 + shd) * m3)
        packed['w3d'] = w3d.astype(jnp.bfloat16)
    else:
        w3m = jnp.zeros((cm_p, cout_p), jnp.float32).at[:cm, :cout].set(
            jnp.transpose(w3f[:, :, 0, 0], (1, 0)))
        packed['w3'] = w3m.astype(jnp.bfloat16)
        packed['s3'] = jnp.zeros((1, cout_p), jnp.float32).at[0, :cout].set(sh3)
        packed['m3'] = jnp.zeros((1, cout_p), jnp.float32).at[0, :cout].set(m3)

    cfg = dict(stride=stride, cin=cin, cm=cm, cout=cout,
               cin_p=cin_p, cm_p=cm_p, cout_p=cout_p, has_down=has_down)
    return packed, cfg


# -----------------------------------------------------------------------------
# Forward: layout plumbing (halo windows, phase regroup) + one pallas_call.
# -----------------------------------------------------------------------------
def bottleneck_mask_forward(x_nchw, packed, cfg):
    s = cfg['stride']
    cin, cout = cfg['cin'], cfg['cout']
    cin_p, cm_p, cout_p = cfg['cin_p'], cfg['cm_p'], cfg['cout_p']
    has_down = cfg['has_down']

    N, C, H, W = x_nchw.shape
    assert C == cin
    Ho = (H + 2 - 3) // s + 1
    Wo = (W + 2 - 3) // s + 1

    TH = _choose_tile_h(N, Ho, Wo)
    num_tiles = Ho // TH
    RP = TH + (2 if s == 1 else 1)           # rows per stride-phase group (incl. halo)
    CP = Wo + (2 if s == 1 else 1)
    CP_pad = _round_up(CP, 8)                # keep the W axis sublane-aligned
    HB, WB = s * RP, s * CP_pad

    # NHWC, bf16 FIRST (halve wrapper bytes), append the indicator channel, pad to 128.
    xh = jnp.transpose(x_nchw, (0, 2, 3, 1)).astype(jnp.bfloat16)
    xe = jnp.zeros((N, H, W, cin_p), jnp.bfloat16)
    xe = xe.at[..., :cin].set(xh).at[..., cin].set(1.0)

    # spatial zero padding (indicator is 0 there -> conv2 padding ring handled for free)
    Hneed = s * ((num_tiles - 1) * TH + RP)
    Wneed = s * CP_pad
    xp = jnp.pad(xe, ((0, 0), (1, Hneed - 1 - H), (1, Wneed - 1 - W), (0, 0)))

    # column stride-phase regroup: col slot pc*CP_pad + v  <->  padded col s*v + pc
    col_groups = [xp[:, :, pc::s, :][:, :, :CP_pad, :] for pc in range(s)]
    cols = jnp.concatenate(col_groups, axis=2) if s > 1 else col_groups[0]

    # row stride-phase regroup + per-tile halo windows (tiny halo duplication only)
    parts = []
    for pr in range(s):
        ph = cols[:, pr::s, :, :]
        parts.append(jnp.stack([ph[:, t * TH:t * TH + RP] for t in range(num_tiles)],
                               axis=1))
    x_tiles = jnp.concatenate(parts, axis=2) if s > 1 else parts[0]
    x_tiles = x_tiles.reshape(N * num_tiles, HB, WB, cin_p)

    kernel = _make_kernel(dict(stride=s, tile_h=TH, wo=Wo, rp=RP, cp_pad=CP_pad,
                               hb=HB, wb=WB, cin_p=cin_p, cm_p=cm_p, cout_p=cout_p,
                               has_down=has_down))

    def const(shape):
        return pl.BlockSpec(shape, lambda *_, _n=len(shape): (0,) * _n)

    in_specs = [pl.BlockSpec((None, HB, WB, cin_p), lambda i: (i, 0, 0, 0)),
                const((cin_p, cm_p)),        # w1 (+bn1, +mask1, shift on indicator row)
                const((9, cm_p, cm_p)),      # w2 (+bn2 scale, +mask2)
                const((1, cm_p))]            # bn2 shift * mask2
    args = [x_tiles, packed['w1'], packed['w2'], packed['s2']]
    if has_down:
        in_specs.append(const((cm_p + cin_p, cout_p)))        # [w3 ; wd] (+mask3, shifts)
        args.append(packed['w3d'])
    else:
        in_specs += [const((cm_p, cout_p)), const((1, cout_p)), const((1, cout_p))]
        args += [packed['w3'], packed['s3'], packed['m3']]

    out = pl.pallas_call(
        kernel,
        out_shape=jax.ShapeDtypeStruct((N * num_tiles, TH * Wo, cout_p), jnp.float32),
        grid=(N * num_tiles,),
        in_specs=in_specs,
        out_specs=pl.BlockSpec((None, TH * Wo, cout_p), lambda i: (i, 0, 0)),
        compiler_params=pltpu.CompilerParams(dimension_semantics=("parallel",)),
    )(*args)

    out = out.reshape(N, Ho, Wo, cout_p)[..., :cout]
    return jnp.transpose(out, (0, 3, 1, 2))                   # NCHW to match PyTorch


# -----------------------------------------------------------------------------
# Deterministic synthetic parameters (torch layouts) — no checkpoint load.
# -----------------------------------------------------------------------------
def _bn_params(key, c):
    k1, k2, k3, k4 = jax.random.split(key, 4)
    return dict(gamma=1.0 + 0.1 * jax.random.normal(k1, (c,), jnp.float32),
                beta=0.1 * jax.random.normal(k2, (c,), jnp.float32),
                mean=0.1 * jax.random.normal(k3, (c,), jnp.float32),
                var=1.0 + 0.5 * jax.random.uniform(k4, (c,), jnp.float32))


def init_raw_params(key, cin, planes, expansion=4, stride=1):
    cout = planes * expansion
    keys = jax.random.split(key, 11)

    def he(k, shape, fan):
        return jax.random.normal(k, shape, jnp.float32) * math.sqrt(2.0 / fan)

    raw = dict(
        conv1_w=he(keys[0], (planes, cin, 1, 1), cin),
        bn1=_bn_params(keys[1], planes),
        mask1=jax.random.uniform(keys[2], (planes,), jnp.float32),
        conv2_w=he(keys[3], (planes, planes, 3, 3), planes * 9),
        bn2=_bn_params(keys[4], planes),
        mask2=jax.random.uniform(keys[5], (planes,), jnp.float32),
        conv3_w=he(keys[6], (cout, planes, 1, 1), planes),
        bn3=_bn_params(keys[7], cout),
        mask3=jax.random.uniform(keys[8], (cout,), jnp.float32),
        down_w=None, down_bn=None,
    )
    if stride != 1 or cin != cout:
        raw['down_w'] = he(keys[9], (cout, cin, 1, 1), cin)
        raw['down_bn'] = _bn_params(keys[10], cout)
    return raw


if __name__ == "__main__":
    key = jax.random.PRNGKey(0)
    k1, k2, k3, k4 = jax.random.split(key, 4)

    # Config A: stride-2 bottleneck with (1x1 conv + BN) downsample, NCHW input.
    N, Cin, H, W = 2, 16, 16, 16
    planes, expansion, stride = 16, 4, 2
    xA = jax.random.normal(k1, (N, Cin, H, W), jnp.float32)
    rawA = init_raw_params(k2, Cin, planes, expansion, stride)
    packedA, cfgA = prepare_params(rawA, stride)
    outA = jax.block_until_ready(
        jax.jit(lambda v: bottleneck_mask_forward(v, packedA, cfgA))(xA))
    assert outA.shape == (N, planes * expansion, H // stride, W // stride)
    assert outA.dtype == jnp.float32

    # Config B: stride-1 identity-residual bottleneck (downsample is None).
    Nb, Cb, Hb, Wb = 2, 64, 8, 8
    xB = jax.random.normal(k3, (Nb, Cb, Hb, Wb), jnp.float32)
    rawB = init_raw_params(k4, Cb, 16, 4, 1)
    packedB, cfgB = prepare_params(rawB, 1)
    outB = jax.block_until_ready(
        jax.jit(lambda v: bottleneck_mask_forward(v, packedB, cfgB))(xB))
    assert outB.shape == (Nb, 64, Hb, Wb)

    print("KERNEL_OK")
</pallas_src>

<mosaic_0001>
module attributes {stable_mosaic.version = 11 : i64} {
  func.func @kernel(%arg0: i32, %arg1: memref<1x10x32x128xbf16, #tpu.memory_space<vmem>>, %arg2: memref<128x128xbf16, #tpu.memory_space<vmem>>, %arg3: memref<9x128x128xbf16, #tpu.memory_space<vmem>>, %arg4: memref<1x128xf32, #tpu.memory_space<vmem>>, %arg5: memref<256x128xbf16, #tpu.memory_space<vmem>>, %arg6: memref<1x32x128xf32, #tpu.memory_space<vmem>>) attributes {dimension_semantics = [#tpu.dimension_semantics<parallel>], iteration_bounds = array<i64: 4>, scalar_prefetch = 0 : i64, scratch_operands = 0 : i64, tpu.core_type = #tpu.core_type<tc>, window_params = [{transform_indices = @transform_0, window_bounds = array<i64: 1, 10, 32, 128>}, {pipeline_mode = #tpu.pipeline_mode<synchronous>, transform_indices = @transform_1, window_bounds = array<i64: 128, 128>}, {pipeline_mode = #tpu.pipeline_mode<synchronous>, transform_indices = @transform_2, window_bounds = array<i64: 9, 128, 128>}, {pipeline_mode = #tpu.pipeline_mode<synchronous>, transform_indices = @transform_3, window_bounds = array<i64: 1, 128>}, {pipeline_mode = #tpu.pipeline_mode<synchronous>, transform_indices = @transform_4, window_bounds = array<i64: 256, 128>}, {transform_indices = @transform_5, window_bounds = array<i64: 1, 32, 128>}]} {
    %c0 = arith.constant 0 : index
    %c0_0 = arith.constant 0 : index
    %c0_1 = arith.constant 0 : index
    %c0_2 = arith.constant 0 : index
    %0 = vector.load %arg1[%c0, %c0_0, %c0_1, %c0_2] : memref<1x10x32x128xbf16, #tpu.memory_space<vmem>>, vector<1x10x32x128xbf16>
    %1 = vector.shape_cast %0 : vector<1x10x32x128xbf16> to vector<10x32x128xbf16>
    %2 = vector.shape_cast %1 : vector<10x32x128xbf16> to vector<320x128xbf16>
    %c0_3 = arith.constant 0 : index
    %c0_4 = arith.constant 0 : index
    %3 = vector.load %arg2[%c0_3, %c0_4] : memref<128x128xbf16, #tpu.memory_space<vmem>>, vector<128x128xbf16>
    %cst = arith.constant dense<0.000000e+00> : vector<320x128xf32>
    %4 = tpu.matmul %2, %3, %cst {dimension_numbers = #tpu.dot_dimension_numbers<[1], [0], [0], [1], [0, 0, 1, 1], [], []>} : vector<320x128xbf16>, vector<128x128xbf16>, vector<320x128xf32> -> vector<320x128xf32>
    %cst_5 = arith.constant 0.000000e+00 : f32
    %5 = vector.broadcast %cst_5 : f32 to vector<320x128xf32>
    %6 = arith.maximumf %4, %5 : vector<320x128xf32>
    %7 = arith.truncf %6 : vector<320x128xf32> to vector<320x128xbf16>
    %8 = vector.shape_cast %7 : vector<320x128xbf16> to vector<10x32x128xbf16>
    %9 = vector.extract_strided_slice %8 {offsets = [0, 0, 0], sizes = [4, 8, 128], strides = [1, 1, 1]} : vector<10x32x128xbf16> to vector<4x8x128xbf16>
    %10 = vector.shape_cast %9 : vector<4x8x128xbf16> to vector<32x128xbf16>
    %c0_6 = arith.constant 0 : index
    %c0_7 = arith.constant 0 : index
    %c0_8 = arith.constant 0 : index
    %11 = vector.load %arg3[%c0_6, %c0_7, %c0_8] : memref<9x128x128xbf16, #tpu.memory_space<vmem>>, vector<1x128x128xbf16>
    %12 = vector.shape_cast %11 : vector<1x128x128xbf16> to vector<128x128xbf16>
    %cst_9 = arith.constant dense<0.000000e+00> : vector<32x128xf32>
    %13 = tpu.matmul %10, %12, %cst_9 {dimension_numbers = #tpu.dot_dimension_numbers<[1], [0], [0], [1], [0, 0, 1, 1], [], []>} : vector<32x128xbf16>, vector<128x128xbf16>, vector<32x128xf32> -> vector<32x128xf32>
    %14 = vector.extract_strided_slice %8 {offsets = [0, 16, 0], sizes = [4, 8, 128], strides = [1, 1, 1]} : vector<10x32x128xbf16> to vector<4x8x128xbf16>
    %15 = vector.shape_cast %14 : vector<4x8x128xbf16> to vector<32x128xbf16>
    %c1 = arith.constant 1 : index
    %c0_10 = arith.constant 0 : index
    %c0_11 = arith.constant 0 : index
    %16 = vector.load %arg3[%c1, %c0_10, %c0_11] : memref<9x128x128xbf16, #tpu.memory_space<vmem>>, vector<1x128x128xbf16>
    %17 = vector.shape_cast %16 : vector<1x128x128xbf16> to vector<128x128xbf16>
    %cst_12 = arith.constant dense<0.000000e+00> : vector<32x128xf32>
    %18 = tpu.matmul %15, %17, %cst_12 {dimension_numbers = #tpu.dot_dimension_numbers<[1], [0], [0], [1], [0, 0, 1, 1], [], []>} : vector<32x128xbf16>, vector<128x128xbf16>, vector<32x128xf32> -> vector<32x128xf32>
    %19 = arith.addf %13, %18 : vector<32x128xf32>
    %20 = vector.extract_strided_slice %8 {offsets = [0, 1, 0], sizes = [4, 8, 128], strides = [1, 1, 1]} : vector<10x32x128xbf16> to vector<4x8x128xbf16>
    %21 = vector.shape_cast %20 : vector<4x8x128xbf16> to vector<32x128xbf16>
    %c2 = arith.constant 2 : index
    %c0_13 = arith.constant 0 : index
    %c0_14 = arith.constant 0 : index
    %22 = vector.load %arg3[%c2, %c0_13, %c0_14] : memref<9x128x128xbf16, #tpu.memory_space<vmem>>, vector<1x128x128xbf16>
    %23 = vector.shape_cast %22 : vector<1x128x128xbf16> to vector<128x128xbf16>
    %cst_15 = arith.constant dense<0.000000e+00> : vector<32x128xf32>
    %24 = tpu.matmul %21, %23, %cst_15 {dimension_numbers = #tpu.dot_dimension_numbers<[1], [0], [0], [1], [0, 0, 1, 1], [], []>} : vector<32x128xbf16>, vector<128x128xbf16>, vector<32x128xf32> -> vector<32x128xf32>
    %25 = arith.addf %19, %24 : vector<32x128xf32>
    %26 = vector.extract_strided_slice %8 {offsets = [5, 0, 0], sizes = [4, 8, 128], strides = [1, 1, 1]} : vector<10x32x128xbf16> to vector<4x8x128xbf16>
    %27 = vector.shape_cast %26 : vector<4x8x128xbf16> to vector<32x128xbf16>
    %c3 = arith.constant 3 : index
    %c0_16 = arith.constant 0 : index
    %c0_17 = arith.constant 0 : index
    %28 = vector.load %arg3[%c3, %c0_16, %c0_17] : memref<9x128x128xbf16, #tpu.memory_space<vmem>>, vector<1x128x128xbf16>
    %29 = vector.shape_cast %28 : vector<1x128x128xbf16> to vector<128x128xbf16>
    %cst_18 = arith.constant dense<0.000000e+00> : vector<32x128xf32>
    %30 = tpu.matmul %27, %29, %cst_18 {dimension_numbers = #tpu.dot_dimension_numbers<[1], [0], [0], [1], [0, 0, 1, 1], [], []>} : vector<32x128xbf16>, vector<128x128xbf16>, vector<32x128xf32> -> vector<32x128xf32>
    %31 = arith.addf %25, %30 : vector<32x128xf32>
    %32 = vector.extract_strided_slice %8 {offsets = [5, 16, 0], sizes = [4, 8, 128], strides = [1, 1, 1]} : vector<10x32x128xbf16> to vector<4x8x128xbf16>
    %33 = vector.shape_cast %32 : vector<4x8x128xbf16> to vector<32x128xbf16>
    %c4 = arith.constant 4 : index
    %c0_19 = arith.constant 0 : index
    %c0_20 = arith.constant 0 : index
    %34 = vector.load %arg3[%c4, %c0_19, %c0_20] : memref<9x128x128xbf16, #tpu.memory_space<vmem>>, vector<1x128x128xbf16>
    %35 = vector.shape_cast %34 : vector<1x128x128xbf16> to vector<128x128xbf16>
    %cst_21 = arith.constant dense<0.000000e+00> : vector<32x128xf32>
    %36 = tpu.matmul %33, %35, %cst_21 {dimension_numbers = #tpu.dot_dimension_numbers<[1], [0], [0], [1], [0, 0, 1, 1], [], []>} : vector<32x128xbf16>, vector<128x128xbf16>, vector<32x128xf32> -> vector<32x128xf32>
    %37 = arith.addf %31, %36 : vector<32x128xf32>
    %38 = vector.extract_strided_slice %8 {offsets = [5, 1, 0], sizes = [4, 8, 128], strides = [1, 1, 1]} : vector<10x32x128xbf16> to vector<4x8x128xbf16>
    %39 = vector.shape_cast %38 : vector<4x8x128xbf16> to vector<32x128xbf16>
    %c5 = arith.constant 5 : index
    %c0_22 = arith.constant 0 : index
    %c0_23 = arith.constant 0 : index
    %40 = vector.load %arg3[%c5, %c0_22, %c0_23] : memref<9x128x128xbf16, #tpu.memory_space<vmem>>, vector<1x128x128xbf16>
    %41 = vector.shape_cast %40 : vector<1x128x128xbf16> to vector<128x128xbf16>
    %cst_24 = arith.constant dense<0.000000e+00> : vector<32x128xf32>
    %42 = tpu.matmul %39, %41, %cst_24 {dimension_numbers = #tpu.dot_dimension_numbers<[1], [0], [0], [1], [0, 0, 1, 1], [], []>} : vector<32x128xbf16>, vector<128x128xbf16>, vector<32x128xf32> -> vector<32x128xf32>
    %43 = arith.addf %37, %42 : vector<32x128xf32>
    %44 = vector.extract_strided_slice %8 {offsets = [1, 0, 0], sizes = [4, 8, 128], strides = [1, 1, 1]} : vector<10x32x128xbf16> to vector<4x8x128xbf16>
    %45 = vector.shape_cast %44 : vector<4x8x128xbf16> to vector<32x128xbf16>
    %c6 = arith.constant 6 : index
    %c0_25 = arith.constant 0 : index
    %c0_26 = arith.constant 0 : index
    %46 = vector.load %arg3[%c6, %c0_25, %c0_26] : memref<9x128x128xbf16, #tpu.memory_space<vmem>>, vector<1x128x128xbf16>
    %47 = vector.shape_cast %46 : vector<1x128x128xbf16> to vector<128x128xbf16>
    %cst_27 = arith.constant dense<0.000000e+00> : vector<32x128xf32>
    %48 = tpu.matmul %45, %47, %cst_27 {dimension_numbers = #tpu.dot_dimension_numbers<[1], [0], [0], [1], [0, 0, 1, 1], [], []>} : vector<32x128xbf16>, vector<128x128xbf16>, vector<32x128xf32> -> vector<32x128xf32>
    %49 = arith.addf %43, %48 : vector<32x128xf32>
    %50 = vector.extract_strided_slice %8 {offsets = [1, 16, 0], sizes = [4, 8, 128], strides = [1, 1, 1]} : vector<10x32x128xbf16> to vector<4x8x128xbf16>
    %51 = vector.shape_cast %50 : vector<4x8x128xbf16> to vector<32x128xbf16>
    %c7 = arith.constant 7 : index
    %c0_28 = arith.constant 0 : index
    %c0_29 = arith.constant 0 : index
    %52 = vector.load %arg3[%c7, %c0_28, %c0_29] : memref<9x128x128xbf16, #tpu.memory_space<vmem>>, vector<1x128x128xbf16>
    %53 = vector.shape_cast %52 : vector<1x128x128xbf16> to vector<128x128xbf16>
    %cst_30 = arith.constant dense<0.000000e+00> : vector<32x128xf32>
    %54 = tpu.matmul %51, %53, %cst_30 {dimension_numbers = #tpu.dot_dimension_numbers<[1], [0], [0], [1], [0, 0, 1, 1], [], []>} : vector<32x128xbf16>, vector<128x128xbf16>, vector<32x128xf32> -> vector<32x128xf32>
    %55 = arith.addf %49, %54 : vector<32x128xf32>
    %56 = vector.extract_strided_slice %8 {offsets = [1, 1, 0], sizes = [4, 8, 128], strides = [1, 1, 1]} : vector<10x32x128xbf16> to vector<4x8x128xbf16>
    %57 = vector.shape_cast %56 : vector<4x8x128xbf16> to vector<32x128xbf16>
    %c8 = arith.constant 8 : index
    %c0_31 = arith.constant 0 : index
    %c0_32 = arith.constant 0 : index
    %58 = vector.load %arg3[%c8, %c0_31, %c0_32] : memref<9x128x128xbf16, #tpu.memory_space<vmem>>, vector<1x128x128xbf16>
    %59 = vector.shape_cast %58 : vector<1x128x128xbf16> to vector<128x128xbf16>
    %cst_33 = arith.constant dense<0.000000e+00> : vector<32x128xf32>
    %60 = tpu.matmul %57, %59, %cst_33 {dimension_numbers = #tpu.dot_dimension_numbers<[1], [0], [0], [1], [0, 0, 1, 1], [], []>} : vector<32x128xbf16>, vector<128x128xbf16>, vector<32x128xf32> -> vector<32x128xf32>
    %61 = arith.addf %55, %60 : vector<32x128xf32>
    %c0_34 = arith.constant 0 : index
    %c0_35 = arith.constant 0 : index
    %62 = vector.load %arg4[%c0_34, %c0_35] : memref<1x128xf32, #tpu.memory_space<vmem>>, vector<1x128xf32>
    %63 = vector.broadcast %62 : vector<1x128xf32> to vector<32x128xf32>
    %64 = arith.addf %61, %63 : vector<32x128xf32>
    %cst_36 = arith.constant 0.000000e+00 : f32
    %65 = vector.broadcast %cst_36 : f32 to vector<32x128xf32>
    %66 = arith.maximumf %64, %65 : vector<32x128xf32>
    %67 = arith.truncf %66 : vector<32x128xf32> to vector<32x128xbf16>
    %68 = vector.extract_strided_slice %1 {offsets = [5, 16, 0], sizes = [4, 8, 128], strides = [1, 1, 1]} : vector<10x32x128xbf16> to vector<4x8x128xbf16>
    %69 = vector.shape_cast %68 : vector<4x8x128xbf16> to vector<32x128xbf16>
    %70 = tpu.concatenate %67, %69 in 1 : vector<32x128xbf16>, vector<32x128xbf16> -> vector<32x256xbf16>
    %c0_37 = arith.constant 0 : index
    %c0_38 = arith.constant 0 : index
    %71 = vector.load %arg5[%c0_37, %c0_38] : memref<256x128xbf16, #tpu.memory_space<vmem>>, vector<256x128xbf16>
    %cst_39 = arith.constant dense<0.000000e+00> : vector<32x128xf32>
    %72 = tpu.matmul %70, %71, %cst_39 {dimension_numbers = #tpu.dot_dimension_numbers<[1], [0], [0], [1], [0, 0, 1, 1], [], []>} : vector<32x256xbf16>, vector<256x128xbf16>, vector<32x128xf32> -> vector<32x128xf32>
    %cst_40 = arith.constant 0.000000e+00 : f32
    %73 = vector.broadcast %cst_40 : f32 to vector<32x128xf32>
    %74 = arith.maximumf %72, %73 : vector<32x128xf32>
    %c0_41 = arith.constant 0 : index
    %c0_42 = arith.constant 0 : index
    %c0_43 = arith.constant 0 : index
    %75 = vector.load %arg6[%c0_41, %c0_42, %c0_43] : memref<1x32x128xf32, #tpu.memory_space<vmem>>, vector<1x32x128xf32>
    %76 = vector.shape_cast %75 : vector<1x32x128xf32> to vector<32x128xf32>
    %77 = vector.shape_cast %74 : vector<32x128xf32> to vector<1x32x128xf32>
    tpu.vector_store %arg6[%c0_41, %c0_42, %c0_43], %77 {strides = array<i32>} : memref<1x32x128xf32, #tpu.memory_space<vmem>>, vector<1x32x128xf32>,
    return
  }
  func.func @transform_0(%arg0: i32) -> (i32, i32, i32, i32) {
    %c0_i32 = arith.constant 0 : i32
    %c0_i32_0 = arith.constant 0 : i32
    %c0_i32_1 = arith.constant 0 : i32
    %c0_i32_2 = arith.constant 0 : i32
    return %arg0, %c0_i32, %c0_i32_0, %c0_i32_1 : i32, i32, i32, i32
  }
  func.func @transform_1(%arg0: i32) -> (i32, i32) {
    %c0_i32 = arith.constant 0 : i32
    %c0_i32_0 = arith.constant 0 : i32
    %c0_i32_1 = arith.constant 0 : i32
    return %c0_i32, %c0_i32_0 : i32, i32
  }
  func.func @transform_2(%arg0: i32) -> (i32, i32, i32) {
    %c0_i32 = arith.constant 0 : i32
    %c0_i32_0 = arith.constant 0 : i32
    %c0_i32_1 = arith.constant 0 : i32
    %c0_i32_2 = arith.constant 0 : i32
    return %c0_i32, %c0_i32_0, %c0_i32_1 : i32, i32, i32
  }
  func.func @transform_3(%arg0: i32) -> (i32, i32) {
    %c0_i32 = arith.constant 0 : i32
    %c0_i32_0 = arith.constant 0 : i32
    %c0_i32_1 = arith.constant 0 : i32
    return %c0_i32, %c0_i32_0 : i32, i32
  }
  func.func @transform_4(%arg0: i32) -> (i32, i32) {
    %c0_i32 = arith.constant 0 : i32
    %c0_i32_0 = arith.constant 0 : i32
    %c0_i32_1 = arith.constant 0 : i32
    return %c0_i32, %c0_i32_0 : i32, i32
  }
  func.func @transform_5(%arg0: i32) -> (i32, i32, i32) {
    %c0_i32 = arith.constant 0 : i32
    %c0_i32_0 = arith.constant 0 : i32
    %c0_i32_1 = arith.constant 0 : i32
    return %arg0, %c0_i32, %c0_i32_0 : i32, i32, i32
  }
}

</mosaic_0001>

<llo_original>
// kernel: _lambda_.1
$region0: #{_lambda_.1}
  #allocation0 [shape = 'u32[]', space=smem, size = 0x4, offset = 0x4, fixed_abs, tag = 'smem constant byte address 0x4 - core index']
  #allocation1 [shape = 'u32[144,128]{1,0:T(1,128)}', space=vmem, size = 0x12000, scoped, tag = 'internal scratch']
  %s0 = inlined_call_operand.vmem [shape: bf16[4,10,32,128], index: 0, kind: input, shape index: {}]
  %s1 = inlined_call_operand.vmem [shape: bf16[128,128], index: 1, kind: input, shape index: {}]
  %s2 = inlined_call_operand.vmem [shape: bf16[9,128,128], index: 2, kind: input, shape index: {}]
  %s3 = inlined_call_operand.vmem [shape: f32[1,128], index: 3, kind: input, shape index: {}]
  %s4 = inlined_call_operand.vmem [shape: bf16[256,128], index: 4, kind: input, shape index: {}]
  %s5 = inlined_call_operand.vmem [shape: f32[4,32,128], index: 5, kind: output, shape index: {}]
  %s6 = sld [smem:[#allocation0]]
  $region53: #{_lambda_.1} parent=0
    _
  %s8 = ssub.s32 1, %s6
  %s9 = scalar_select 0, %s8, %s6
  loop: start=0, step=1, limit=6
  $region2: #{_lambda_.1} parent=0 // loop_pre_header
    _
  $region3: #{_lambda_.1} parent=0 // loop_header
    %s11 = sphi 0, %s15
    %p12 = scmp.ge.s32.totalorder %s11, 6
    %s21 = sphi 0, %s23
    %s24 = sphi 0, %s21
    %s25 = sphi 0, %s24
    %s41 = sphi 0, %s25
    %s45 = sphi 0, %s45
    %s47 = sphi 0, %s45
    %s48 = sphi 0, %s47
    %s62 = sphi 0, %s48
    %s66 = sphi 0, %s66
    %s68 = sphi 0, %s66
    %s69 = sphi 0, %s68
    %s83 = sphi 0, %s69
    %s87 = sphi 0, %s87
    %s89 = sphi 0, %s87
    %s90 = sphi 0, %s89
    %s104 = sphi 0, %s90
    %s108 = sphi 0, %s108
    %s110 = sphi 0, %s108
    %s111 = sphi 0, %s110
    %s125 = sphi 0, %s111
    %s131 = sphi 0, %s133
    %s134 = sphi 0, %s131
    %s135 = sphi 0, %s134
    %s151 = sphi 0, %s135
  $region4: #{_lambda_.1} parent=0 // loop_header_branch
    %14 = sbr.rel (%p12) target = $region8
  $region5: #{_lambda_.1} parent=0 // loop_body
    %s16 = ssub.s32 %s11, 1
    %s17 = ssub.s32 %s11, 2
    %s18 = sadd.s32 %s11, 1
    %s19 = ssub.s32 %s11, %s18
    %p20 = scmp.eq.s32.totalorder %s19, 0
    %s22 = sadd.s32 %s21, 1
    %s23 = scalar_select %p20, %s21, %s22
    %p26 = pneg %p20
    %p27 = scmp.eq.s32.totalorder %s11, 3
    %p28 = por %p26, %p27
    %p29 = scmp.ne.s32.totalorder %s21, %s24
    %p30 = scmp.eq.s32.totalorder %s11, 0
    %p31 = por %p29, %p30
    %p32 = scmp.ne.s32.totalorder %s21, %s24
    %p33 = scmp.eq.s32.totalorder %s16, 3
    %p34 = por %p32, %p33
    %p35 = scmp.ne.s32.totalorder %s24, %s25
    %p36 = scmp.eq.s32.totalorder %s16, 0
    %p37 = por %p35, %p36
    %p38 = scmp.ne.s32.totalorder %s24, %s25
    %p39 = scmp.eq.s32.totalorder %s17, 3
    %p40 = por %p38, %p39
    %p42 = scmp.ne.s32.totalorder %s25, %s41
    %p43 = scmp.eq.s32.totalorder %s17, 0
    %p44 = por %p42, %p43
    %s46 = sadd.s32 %s45, 1
    %p49 = scmp.eq.s32.totalorder %s11, 3
    %p50 = scmp.ne.s32.totalorder %s45, %s47
    %p51 = scmp.eq.s32.totalorder %s11, 0
    %p52 = por %p50, %p51
    %p53 = scmp.ne.s32.totalorder %s45, %s47
    %p54 = scmp.eq.s32.totalorder %s16, 3
    %p55 = por %p53, %p54
    %p56 = scmp.ne.s32.totalorder %s47, %s48
    %p57 = scmp.eq.s32.totalorder %s16, 0
    %p58 = por %p56, %p57
    %p59 = scmp.ne.s32.totalorder %s47, %s48
    %p60 = scmp.eq.s32.totalorder %s17, 3
    %p61 = por %p59, %p60
    %p63 = scmp.ne.s32.totalorder %s48, %s62
    %p64 = scmp.eq.s32.totalorder %s17, 0
    %p65 = por %p63, %p64
    %s67 = sadd.s32 %s66, 1
    %p70 = scmp.eq.s32.totalorder %s11, 3
    %p71 = scmp.ne.s32.totalorder %s66, %s68
    %p72 = scmp.eq.s32.totalorder %s11, 0
    %p73 = por %p71, %p72
    %p74 = scmp.ne.s32.totalorder %s66, %s68
    %p75 = scmp.eq.s32.totalorder %s16, 3
    %p76 = por %p74, %p75
    %p77 = scmp.ne.s32.totalorder %s68, %s69
    %p78 = scmp.eq.s32.totalorder %s16, 0
    %p79 = por %p77, %p78
    %p80 = scmp.ne.s32.totalorder %s68, %s69
    %p81 = scmp.eq.s32.totalorder %s17, 3
    %p82 = por %p80, %p81
    %p84 = scmp.ne.s32.totalorder %s69, %s83
    %p85 = scmp.eq.s32.totalorder %s17, 0
    %p86 = por %p84, %p85
    %s88 = sadd.s32 %s87, 1
    %p91 = scmp.eq.s32.totalorder %s11, 3
    %p92 = scmp.ne.s32.totalorder %s87, %s89
    %p93 = scmp.eq.s32.totalorder %s11, 0
    %p94 = por %p92, %p93
    %p95 = scmp.ne.s32.totalorder %s87, %s89
    %p96 = scmp.eq.s32.totalorder %s16, 3
    %p97 = por %p95, %p96
    %p98 = scmp.ne.s32.totalorder %s89, %s90
    %p99 = scmp.eq.s32.totalorder %s16, 0
    %p100 = por %p98, %p99
    %p101 = scmp.ne.s32.totalorder %s89, %s90
    %p102 = scmp.eq.s32.totalorder %s17, 3
    %p103 = por %p101, %p102
    %p105 = scmp.ne.s32.totalorder %s90, %s104
    %p106 = scmp.eq.s32.totalorder %s17, 0
    %p107 = por %p105, %p106
    %s109 = sadd.s32 %s108, 1
    %p112 = scmp.eq.s32.totalorder %s11, 3
    %p113 = scmp.ne.s32.totalorder %s108, %s110
    %p114 = scmp.eq.s32.totalorder %s11, 0
    %p115 = por %p113, %p114
    %p116 = scmp.ne.s32.totalorder %s108, %s110
    %p117 = scmp.eq.s32.totalorder %s16, 3
    %p118 = por %p116, %p117
    %p119 = scmp.ne.s32.totalorder %s110, %s111
    %p120 = scmp.eq.s32.totalorder %s16, 0
    %p121 = por %p119, %p120
    %p122 = scmp.ne.s32.totalorder %s110, %s111
    %p123 = scmp.eq.s32.totalorder %s17, 3
    %p124 = por %p122, %p123
    %p126 = scmp.ne.s32.totalorder %s111, %s125
    %p127 = scmp.eq.s32.totalorder %s17, 0
    %p128 = por %p126, %p127
    %s129 = ssub.s32 %s11, %s18
    %p130 = scmp.eq.s32.totalorder %s129, 0
    %s132 = sadd.s32 %s131, 1
    %s133 = scalar_select %p130, %s131, %s132
    %p136 = pneg %p130
    %p137 = scmp.eq.s32.totalorder %s11, 3
    %p138 = por %p136, %p137
    %p139 = scmp.ne.s32.totalorder %s131, %s134
    %p140 = scmp.eq.s32.totalorder %s11, 0
    %p141 = por %p139, %p140
    %p142 = scmp.ne.s32.totalorder %s131, %s134
    %p143 = scmp.eq.s32.totalorder %s16, 3
    %p144 = por %p142, %p143
    %p145 = scmp.ne.s32.totalorder %s134, %s135
    %p146 = scmp.eq.s32.totalorder %s16, 0
    %p147 = por %p145, %p146
    %p148 = scmp.ne.s32.totalorder %s134, %s135
    %p149 = scmp.eq.s32.totalorder %s17, 3
    %p150 = por %p148, %p149
    %p152 = scmp.ne.s32.totalorder %s135, %s151
    %p153 = scmp.eq.s32.totalorder %s17, 0
    %p154 = por %p152, %p153
    %p155 = scmp.le.s32.totalorder 1, %s11
    %p156 = scmp.lt.s32.totalorder %s11, 5
    %p157 = pnand %p155, %p156
    %p158 = pneg %p157
    // Predicated region
    $region9: #{_lambda_.1} parent=5 // pred_check
      _
    $region10: #{_lambda_.1} parent=5 // pred_check_branch
      %160 = sbr.rel (%p157) target = $region12
    $region11: #{_lambda_.1} parent=5 // pred_region
      %s161 = ssub.s32 %s11, 1
      // Predicated region
      $region13: #{_lambda_.1} parent=11 // pred_check
        %p162 = pneg %p58
      $region14: #{_lambda_.1} parent=11 // pred_check_branch
        %164 = sbr.rel (%p162) target = $region16
      $region15: #{_lambda_.1} parent=11 // pred_region
        _
      $region16: #{_lambda_.1} parent=11 // pred_fallthru
        _
      // Predicated region
      $region17: #{_lambda_.1} parent=11 // pred_check
        %p165 = pneg %p79
      $region18: #{_lambda_.1} parent=11 // pred_check_branch
        %167 = sbr.rel (%p165) target = $region20
      $region19: #{_lambda_.1} parent=11 // pred_region
        _
      $region20: #{_lambda_.1} parent=11 // pred_fallthru
        _
      // Predicated region
      $region21: #{_lambda_.1} parent=11 // pred_check
        %p168 = pneg %p100
      $region22: #{_lambda_.1} parent=11 // pred_check_branch
        %170 = sbr.rel (%p168) target = $region24
      $region23: #{_lambda_.1} parent=11 // pred_region
        _
      $region24: #{_lambda_.1} parent=11 // pred_fallthru
        _
      // Predicated region
      $region25: #{_lambda_.1} parent=11 // pred_check
        %p171 = pneg %p121
      $region26: #{_lambda_.1} parent=11 // pred_check_branch
        %173 = sbr.rel (%p171) target = $region28
      $region27: #{_lambda_.1} parent=11 // pred_region
        _
      $region28: #{_lambda_.1} parent=11 // pred_fallthru
        _
    $region12: #{_lambda_.1} parent=5 // pred_fallthru
      _
    %p174 = scmp.lt.s32.totalorder %s11, 4
    // Predicated region
    $region29: #{_lambda_.1} parent=5 // pred_check
      %p175 = pneg %p174
    $region30: #{_lambda_.1} parent=5 // pred_check_branch
      %177 = sbr.rel (%p175) target = $region32
    $region31: #{_lambda_.1} parent=5 // pred_region
      // Predicated region
      $region33: #{_lambda_.1} parent=31 // pred_check
        %p178 = pneg %p31
      $region34: #{_lambda_.1} parent=31 // pred_check_branch
        %180 = sbr.rel (%p178) target = $region36
      $region35: #{_lambda_.1} parent=31 // pred_region
        %p181 = scmp.lt.s32.totalorder %s11, 3
        %s182 = scalar_select %p181, %s11, 3
        %s183 = smul.addr %s182, 40
        %s184 = smul.addr %s183, 4
        %s185 = scalar_lea.vmem %s0, %s184
      $region36: #{_lambda_.1} parent=31 // pred_fallthru
        _
    $region32: #{_lambda_.1} parent=5 // pred_fallthru
      _
    %p186 = scmp.le.s32.totalorder 1, %s11
    %p187 = scmp.lt.s32.totalorder %s11, 5
    %p188 = pnand %p186, %p187
    %p189 = pneg %p188
    // Predicated region
    $region37: #{_lambda_.1} parent=5 // pred_check
      _
    $region38: #{_lambda_.1} parent=5 // pred_check_branch
      %191 = sbr.rel (%p188) target = $region40
    $region39: #{_lambda_.1} parent=5 // pred_region
      %s192 = ssub.s32 %s11, 1
      %p193 = scmp.lt.s32.totalorder %s16, 3
      %s194 = scalar_select %p193, %s16, 3
      %s195 = smul.addr %s194, 40
      %s196 = smul.addr %s195, 4
      %s197 = scalar_lea.vmem %s0, %s196
      %p198 = pneg %p37
      %p199 = pneg %p34
      %p200 = pneg %p58
      %p201 = pneg %p55
      %p202 = pneg %p79
      %p203 = pneg %p76
      %p204 = pneg %p100
      %p205 = pneg %p97
      %p206 = pneg %p121
      %p207 = pneg %p118
      %p208 = pneg %p147
      %p209 = pneg %p144
      %p210 = scmp.lt.s32.totalorder %s16, 3
      %s211 = scalar_select %p210, %s16, 3
      %s212 = smul.addr %s211, 4
      %s213 = smul.addr %s212, 8
      %s214 = scalar_lea.vmem %s5, %s213
      %p215 = scmp.lt.s32.totalorder %s16, 3
      %s216 = scalar_select %p215, %s16, 3
      %s217 = smul.addr %s216, 40
      %s218 = smul.addr %s217, 4
      %s219 = scalar_lea.vmem %s0, %s218
      %p220 = scmp.lt.s32.totalorder %s16, 3
      %s221 = scalar_select %p220, %s16, 3
      %s222 = smul.addr %s221, 4
      %s223 = smul.addr %s222, 8
      %s224 = scalar_lea.vmem %s5, %s223
      %v226 = vld [vmem:[%s219] sm:$0xf]
      %v227 = vld [vmem:[%s219 + $0x4] sm:$0xf]
      %v228 = vld [vmem:[%s219 + $0x8] sm:$0xf]
      %v229 = vld [vmem:[%s219 + $0xc] sm:$0xf]
      %v230 = vld [vmem:[%s219 + $0x10] sm:$0xf]
      %v231 = vld [vmem:[%s219 + $0x14] sm:$0xf]
      %v232 = vld [vmem:[%s219 + $0x18] sm:$0xf]
      %v233 = vld [vmem:[%s219 + $0x1c] sm:$0xf]
      %v234 = vld [vmem:[%s219 + $0x20] sm:$0xf]
      %v235 = vld [vmem:[%s219 + $0x24] sm:$0xf]
      %v236 = vld [vmem:[%s219 + $0x28] sm:$0xf]
      %v237 = vld [vmem:[%s219 + $0x2c] sm:$0xf]
      %v238 = vld [vmem:[%s219 + $0x30] sm:$0xf]
      %v239 = vld [vmem:[%s219 + $0x34] sm:$0xf]
      %v240 = vld [vmem:[%s219 + $0x38] sm:$0xf]
      %v241 = vld [vmem:[%s219 + $0x3c] sm:$0xf]
      %v242 = vld [vmem:[%s219 + $0x40] sm:$0xf]
      %v243 = vld [vmem:[%s219 + $0x44] sm:$0xf]
      %v244 = vld [vmem:[%s219 + $0x48] sm:$0xf]
      %v245 = vld [vmem:[%s219 + $0x4c] sm:$0xf]
      %v246 = vld [vmem:[%s219 + $0x50] sm:$0xf]
      %v247 = vld [vmem:[%s219 + $0x54] sm:$0xf]
      %v248 = vld [vmem:[%s219 + $0x58] sm:$0xf]
      %v249 = vld [vmem:[%s219 + $0x5c] sm:$0xf]
      %v250 = vld [vmem:[%s219 + $0x60] sm:$0xf]
      %v251 = vld [vmem:[%s219 + $0x64] sm:$0xf]
      %v252 = vld [vmem:[%s219 + $0x68] sm:$0xf]
      %v253 = vld [vmem:[%s219 + $0x6c] sm:$0xf]
      %v254 = vld [vmem:[%s219 + $0x70] sm:$0xf]
      %v255 = vld [vmem:[%s219 + $0x74] sm:$0xf]
      %v256 = vld [vmem:[%s219 + $0x78] sm:$0xf]
      %v257 = vld [vmem:[%s219 + $0x7c] sm:$0xf]
      %v258 = vld [vmem:[%s219 + $0x80] sm:$0xf]
      %v259 = vld [vmem:[%s219 + $0x84] sm:$0xf]
      %v260 = vld [vmem:[%s219 + $0x88] sm:$0xf]
      %v261 = vld [vmem:[%s219 + $0x8c] sm:$0xf]
      %v262 = vld [vmem:[%s219 + $0x90] sm:$0xf]
      %v263 = vld [vmem:[%s219 + $0x94] sm:$0xf]
      %v264 = vld [vmem:[%s219 + $0x98] sm:$0xf]
      %v265 = vld [vmem:[%s219 + $0x9c] sm:$0xf]
      %v266 = vld [vmem:[%s1] sm:$0xf]
      %v267 = vld [vmem:[%s1 + $0x4] sm:$0xf]
      %v268 = vld [vmem:[%s1 + $0x8] sm:$0xf]
      %v269 = vld [vmem:[%s1 + $0xc] sm:$0xf]
      %v270 = vld [vmem:[%s1 + $0x10] sm:$0xf]
      %v271 = vld [vmem:[%s1 + $0x14] sm:$0xf]
      %v272 = vld [vmem:[%s1 + $0x18] sm:$0xf]
      %v273 = vld [vmem:[%s1 + $0x1c] sm:$0xf]
      %v274 = vld [vmem:[%s1 + $0x20] sm:$0xf]
      %v275 = vld [vmem:[%s1 + $0x24] sm:$0xf]
      %v276 = vld [vmem:[%s1 + $0x28] sm:$0xf]
      %v277 = vld [vmem:[%s1 + $0x2c] sm:$0xf]
      %v278 = vld [vmem:[%s1 + $0x30] sm:$0xf]
      %v279 = vld [vmem:[%s1 + $0x34] sm:$0xf]
      %v280 = vld [vmem:[%s1 + $0x38] sm:$0xf]
      %v281 = vld [vmem:[%s1 + $0x3c] sm:$0xf]
      %v322 = vunpack.c.l.b16 %v226
      %v323 = vunpack.c.l.b16 %v227
      %v324 = vunpack.c.l.b16 %v228
      %v325 = vunpack.c.l.b16 %v229
      %v326 = vunpack.c.l.b16 %v230
      %v327 = vunpack.c.l.b16 %v231
      %v328 = vunpack.c.l.b16 %v232
      %v329 = vunpack.c.l.b16 %v233
      %v330 = vunpack.c.l.b16 %v234
      %v331 = vunpack.c.l.b16 %v235
      %v332 = vunpack.c.l.b16 %v236
      %v333 = vunpack.c.l.b16 %v237
      %v334 = vunpack.c.l.b16 %v238
      %v335 = vunpack.c.l.b16 %v239
      %v336 = vunpack.c.l.b16 %v240
      %v337 = vunpack.c.l.b16 %v241
      %v338 = vunpack.c.l.b16 %v242
      %v339 = vunpack.c.l.b16 %v243
      %v340 = vunpack.c.l.b16 %v244
      %v341 = vunpack.c.l.b16 %v245
      %v342 = vunpack.c.l.b16 %v246
      %v343 = vunpack.c.l.b16 %v247
      %v344 = vunpack.c.l.b16 %v248
      %v345 = vunpack.c.l.b16 %v249
      %v346 = vunpack.c.l.b16 %v250
      %v347 = vunpack.c.l.b16 %v251
      %v348 = vunpack.c.l.b16 %v252
      %v349 = vunpack.c.l.b16 %v253
      %v350 = vunpack.c.l.b16 %v254
      %v351 = vunpack.c.l.b16 %v255
      %v352 = vunpack.c.l.b16 %v256
      %v353 = vunpack.c.l.b16 %v257
      %v354 = vunpack.c.l.b16 %v258
      %v355 = vunpack.c.l.b16 %v259
      %v356 = vunpack.c.l.b16 %v260
      %v357 = vunpack.c.l.b16 %v261
      %v358 = vunpack.c.l.b16 %v262
      %v359 = vunpack.c.l.b16 %v263
      %v360 = vunpack.c.l.b16 %v264
      %v361 = vunpack.c.l.b16 %v265
      %v362 = vpack.c.b16 %v323, %v322
      %v363 = vpack.c.b16 %v325, %v324
      %v364 = vpack.c.b16 %v327, %v326
      %v365 = vpack.c.b16 %v329, %v328
      %v366 = vpack.c.b16 %v331, %v330
      %v367 = vpack.c.b16 %v333, %v332
      %v368 = vpack.c.b16 %v335, %v334
      %v369 = vpack.c.b16 %v337, %v336
      %v370 = vpack.c.b16 %v339, %v338
      %v371 = vpack.c.b16 %v341, %v340
      %v372 = vpack.c.b16 %v343, %v342
      %v373 = vpack.c.b16 %v345, %v344
      %v374 = vpack.c.b16 %v347, %v346
      %v375 = vpack.c.b16 %v349, %v348
      %v376 = vpack.c.b16 %v351, %v350
      %v377 = vpack.c.b16 %v353, %v352
      %v378 = vpack.c.b16 %v355, %v354
      %v379 = vpack.c.b16 %v357, %v356
      %v380 = vpack.c.b16 %v359, %v358
      %v381 = vpack.c.b16 %v361, %v360
      %v418 = vunpack.c.l.b16 %v266
      %v419 = vunpack.c.l.b16 %v267
      %v420 = vunpack.c.l.b16 %v268
      %v421 = vunpack.c.l.b16 %v269
      %v422 = vunpack.c.l.b16 %v270
      %v423 = vunpack.c.l.b16 %v271
      %v424 = vunpack.c.l.b16 %v272
      %v425 = vunpack.c.l.b16 %v273
      %v426 = vunpack.c.l.b16 %v274
      %v427 = vunpack.c.l.b16 %v275
      %v428 = vunpack.c.l.b16 %v276
      %v429 = vunpack.c.l.b16 %v277
      %v430 = vunpack.c.l.b16 %v278
      %v431 = vunpack.c.l.b16 %v279
      %v432 = vunpack.c.l.b16 %v280
      %v433 = vunpack.c.l.b16 %v281
      %v434 = vpack.c.b16 %v419, %v418
      %v435 = vpack.c.b16 %v421, %v420
      %v436 = vpack.c.b16 %v423, %v422
      %v437 = vpack.c.b16 %v425, %v424
      %v438 = vpack.c.b16 %v427, %v426
      %v439 = vpack.c.b16 %v429, %v428
      %v440 = vpack.c.b16 %v431, %v430
      %v441 = vpack.c.b16 %v433, %v432
      %450 = vmatprep.subr.bf16.mxu0 0
      %451 = vmatpush1.bf16.msra.mxu0 %v434
      %452 = vmatprep.subr.bf16.mxu0 0
      %453 = vmatpush1.bf16.msra.mxu0 %v435
      %454 = vmatprep.subr.bf16.mxu0 0
      %455 = vmatpush1.bf16.msra.mxu0 %v436
      %456 = vmatprep.subr.bf16.mxu0 0
      %457 = vmatpush1.bf16.msra.mxu0 %v437
      %458 = vmatprep.subr.bf16.mxu0 0
      %459 = vmatpush1.bf16.msra.mxu0 %v438
      %460 = vmatprep.subr.bf16.mxu0 0
      %461 = vmatpush1.bf16.msra.mxu0 %v439
      %462 = vmatprep.subr.bf16.mxu0 0
      %463 = vmatpush1.bf16.msra.mxu0 %v440
      %464 = vmatprep.subr.bf16.mxu0 0
      %465 = vmatpush1.bf16.msra.mxu0 %v441
      %466 = vmatprep.subr.bf16.mxu0 0
      %467 = vmatpush1.bf16.msra.mxu0 0
      %468 = vmatprep.subr.bf16.mxu0 0
      %469 = vmatpush1.bf16.msra.mxu0 0
      %470 = vmatprep.subr.bf16.mxu0 0
      %471 = vmatpush1.bf16.msra.mxu0 0
      %472 = vmatprep.subr.bf16.mxu0 0
      %473 = vmatpush1.bf16.msra.mxu0 0
      %474 = vmatprep.subr.bf16.mxu0 0
      %475 = vmatpush1.bf16.msra.mxu0 0
      %476 = vmatprep.subr.bf16.mxu0 0
      %477 = vmatpush1.bf16.msra.mxu0 0
      %478 = vmatprep.subr.bf16.mxu0 0
      %479 = vmatpush1.bf16.msra.mxu0 0
      %480 = vmatprep.subr.bf16.mxu0 0
      %481 = vmatpush1.bf16.msra.mxu0 0
      %482 = vmatprep.mubr.bf16.mxu0 0
      %483 = vmatmul.mubr.bf16.gmra.mrb[0].mxu0 %v362
      %v484 = vpop.f32.mrb[0].mxu0
      %v485 = vadd.f32 0.0, %v484
      %v486 = vpop.f32.mrb[0].mxu0
      %v487 = vpop.f32.mrb[0].mxu0
      %v488 = vadd.f32 0.0, %v487
      %v489 = vpop.f32.mrb[0].mxu0
      %490 = vmatprep.mubr.bf16.mxu0 0
      %491 = vmatmul.mubr.bf16.gmra.mrb[0].mxu0 %v363
      %v492 = vpop.f32.mrb[0].mxu0
      %v493 = vadd.f32 0.0, %v492
      %v494 = vpop.f32.mrb[0].mxu0
      %v495 = vpop.f32.mrb[0].mxu0
      %v496 = vadd.f32 0.0, %v495
      %v497 = vpop.f32.mrb[0].mxu0
      %498 = vmatprep.mubr.bf16.mxu0 0
      %499 = vmatmul.mubr.bf16.gmra.mrb[0].mxu0 %v364
      %v500 = vpop.f32.mrb[0].mxu0
      %v501 = vadd.f32 0.0, %v500
      %v502 = vpop.f32.mrb[0].mxu0
      %v503 = vpop.f32.mrb[0].mxu0
      %v504 = vadd.f32 0.0, %v503
      %v505 = vpop.f32.mrb[0].mxu0
      %506 = vmatprep.mubr.bf16.mxu0 0
      %507 = vmatmul.mubr.bf16.gmra.mrb[0].mxu0 %v365
      %v508 = vpop.f32.mrb[0].mxu0
      %v509 = vadd.f32 0.0, %v508
      %v510 = vpop.f32.mrb[0].mxu0
      %v511 = vpop.f32.mrb[0].mxu0
      %v512 = vadd.f32 0.0, %v511
      %v513 = vpop.f32.mrb[0].mxu0
      %514 = vmatprep.mubr.bf16.mxu0 0
      %515 = vmatmul.mubr.bf16.gmra.mrb[0].mxu0 %v366
      %v516 = vpop.f32.mrb[0].mxu0
      %v517 = vadd.f32 0.0, %v516
      %v518 = vpop.f32.mrb[0].mxu0
      %v519 = vpop.f32.mrb[0].mxu0
      %v520 = vadd.f32 0.0, %v519
      %v521 = vpop.f32.mrb[0].mxu0
      %522 = vmatprep.mubr.bf16.mxu0 0
      %523 = vmatmul.mubr.bf16.gmra.mrb[0].mxu0 %v367
      %v524 = vpop.f32.mrb[0].mxu0
      %v525 = vadd.f32 0.0, %v524
      %v526 = vpop.f32.mrb[0].mxu0
      %v527 = vpop.f32.mrb[0].mxu0
      %v528 = vadd.f32 0.0, %v527
      %v529 = vpop.f32.mrb[0].mxu0
      %530 = vmatprep.mubr.bf16.mxu0 0
      %531 = vmatmul.mubr.bf16.gmra.mrb[0].mxu0 %v368
      %v532 = vpop.f32.mrb[0].mxu0
      %v533 = vadd.f32 0.0, %v532
      %v534 = vpop.f32.mrb[0].mxu0
      %v535 = vpop.f32.mrb[0].mxu0
      %v536 = vadd.f32 0.0, %v535
      %v537 = vpop.f32.mrb[0].mxu0
      %538 = vmatprep.mubr.bf16.mxu0 0
      %539 = vmatmul.mubr.bf16.gmra.mrb[0].mxu0 %v369
      %v540 = vpop.f32.mrb[0].mxu0
      %v541 = vadd.f32 0.0, %v540
      %v542 = vpop.f32.mrb[0].mxu0
      %v543 = vpop.f32.mrb[0].mxu0
      %v544 = vadd.f32 0.0, %v543
      %v545 = vpop.f32.mrb[0].mxu0
      %546 = vmatprep.mubr.bf16.mxu0 0
      %547 = vmatmul.mubr.bf16.gmra.mrb[0].mxu0 %v370
      %v548 = vpop.f32.mrb[0].mxu0
      %v549 = vadd.f32 0.0, %v548
      %v550 = vpop.f32.mrb[0].mxu0
      %v551 = vpop.f32.mrb[0].mxu0
      %v552 = vadd.f32 0.0, %v551
      %v553 = vpop.f32.mrb[0].mxu0
      %554 = vmatprep.mubr.bf16.mxu0 0
      %555 = vmatmul.mubr.bf16.gmra.mrb[0].mxu0 %v371
      %v556 = vpop.f32.mrb[0].mxu0
      %v557 = vadd.f32 0.0, %v556
      %v558 = vpop.f32.mrb[0].mxu0
      %v559 = vpop.f32.mrb[0].mxu0
      %v560 = vadd.f32 0.0, %v559
      %v561 = vpop.f32.mrb[0].mxu0
      %562 = vmatprep.mubr.bf16.mxu0 0
      %563 = vmatmul.mubr.bf16.gmra.mrb[0].mxu0 %v372
      %v564 = vpop.f32.mrb[0].mxu0
      %v565 = vadd.f32 0.0, %v564
      %v566 = vpop.f32.mrb[0].mxu0
      %v567 = vpop.f32.mrb[0].mxu0
      %v568 = vadd.f32 0.0, %v567
      %v569 = vpop.f32.mrb[0].mxu0
      %570 = vmatprep.mubr.bf16.mxu0 0
      %571 = vmatmul.mubr.bf16.gmra.mrb[0].mxu0 %v373
      %v572 = vpop.f32.mrb[0].mxu0
      %v573 = vadd.f32 0.0, %v572
      %v574 = vpop.f32.mrb[0].mxu0
      %v575 = vpop.f32.mrb[0].mxu0
      %v576 = vadd.f32 0.0, %v575
      %v577 = vpop.f32.mrb[0].mxu0
      %578 = vmatprep.mubr.bf16.mxu0 0
      %579 = vmatmul.mubr.bf16.gmra.mrb[0].mxu0 %v374
      %v580 = vpop.f32.mrb[0].mxu0
      %v581 = vadd.f32 0.0, %v580
      %v582 = vpop.f32.mrb[0].mxu0
      %v583 = vpop.f32.mrb[0].mxu0
      %v584 = vadd.f32 0.0, %v583
      %v585 = vpop.f32.mrb[0].mxu0
      %586 = vmatprep.mubr.bf16.mxu0 0
      %587 = vmatmul.mubr.bf16.gmra.mrb[0].mxu0 %v375
      %v588 = vpop.f32.mrb[0].mxu0
      %v589 = vadd.f32 0.0, %v588
      %v590 = vpop.f32.mrb[0].mxu0
      %v591 = vpop.f32.mrb[0].mxu0
      %v592 = vadd.f32 0.0, %v591
      %v593 = vpop.f32.mrb[0].mxu0
      %594 = vmatprep.mubr.bf16.mxu0 0
      %595 = vmatmul.mubr.bf16.gmra.mrb[0].mxu0 %v376
      %v596 = vpop.f32.mrb[0].mxu0
      %v597 = vadd.f32 0.0, %v596
      %v598 = vpop.f32.mrb[0].mxu0
      %v599 = vpop.f32.mrb[0].mxu0
      %v600 = vadd.f32 0.0, %v599
      %v601 = vpop.f32.mrb[0].mxu0
      %602 = vmatprep.mubr.bf16.mxu0 0
      %603 = vmatmul.mubr.bf16.gmra.mrb[0].mxu0 %v377
      %v604 = vpop.f32.mrb[0].mxu0
      %v605 = vadd.f32 0.0, %v604
      %v606 = vpop.f32.mrb[0].mxu0
      %v607 = vpop.f32.mrb[0].mxu0
      %v608 = vadd.f32 0.0, %v607
      %v609 = vpop.f32.mrb[0].mxu0
      %610 = vmatprep.mubr.bf16.mxu0 0
      %611 = vmatmul.mubr.bf16.gmra.mrb[0].mxu0 %v378
      %v612 = vpop.f32.mrb[0].mxu0
      %v613 = vadd.f32 0.0, %v612
      %v614 = vpop.f32.mrb[0].mxu0
      %v615 = vpop.f32.mrb[0].mxu0
      %v616 = vadd.f32 0.0, %v615
      %v617 = vpop.f32.mrb[0].mxu0
      %618 = vmatprep.mubr.bf16.mxu0 0
      %619 = vmatmul.mubr.bf16.gmra.mrb[0].mxu0 %v379
      %v620 = vpop.f32.mrb[0].mxu0
      %v621 = vadd.f32 0.0, %v620
      %v622 = vpop.f32.mrb[0].mxu0
      %v623 = vpop.f32.mrb[0].mxu0
      %v624 = vadd.f32 0.0, %v623
      %v625 = vpop.f32.mrb[0].mxu0
      %626 = vmatprep.mubr.bf16.mxu0 0
      %627 = vmatmul.mubr.bf16.gmra.mrb[0].mxu0 %v380
      %v628 = vpop.f32.mrb[0].mxu0
      %v629 = vpop.f32.mrb[0].mxu0
      %v630 = vpop.f32.mrb[0].mxu0
      %v631 = vpop.f32.mrb[0].mxu0
      %632 = vmatprep.mubr.bf16.mxu0 0
      %633 = vmatmul.mubr.bf16.gmra.mrb[0].mxu0 %v381
      %v634 = vpop.f32.mrb[0].mxu0
      %v635 = vpop.f32.mrb[0].mxu0
      %v636 = vpop.f32.mrb[0].mxu0
      %v637 = vpop.f32.mrb[0].mxu0
      %638 = vdwg.mxu0
      %v639 = vmax.f32 %v485, 0.0
      %v640 = vmax.f32 %v488, 0.0
      %v641 = vmax.f32 %v493, 0.0
      %v642 = vmax.f32 %v496, 0.0
      %v643 = vmax.f32 %v501, 0.0
      %v644 = vmax.f32 %v504, 0.0
      %v645 = vmax.f32 %v509, 0.0
      %v646 = vmax.f32 %v512, 0.0
      %v647 = vmax.f32 %v517, 0.0
      %v648 = vmax.f32 %v520, 0.0
      %v649 = vmax.f32 %v525, 0.0
      %v650 = vmax.f32 %v528, 0.0
      %v651 = vmax.f32 %v533, 0.0
      %v652 = vmax.f32 %v536, 0.0
      %v653 = vmax.f32 %v541, 0.0
      %v654 = vmax.f32 %v544, 0.0
      %v655 = vmax.f32 %v549, 0.0
      %v656 = vmax.f32 %v552, 0.0
      %v657 = vmax.f32 %v557, 0.0
      %v658 = vmax.f32 %v560, 0.0
      %v659 = vmax.f32 %v565, 0.0
      %v660 = vmax.f32 %v568, 0.0
      %v661 = vmax.f32 %v573, 0.0
      %v662 = vmax.f32 %v576, 0.0
      %v663 = vmax.f32 %v581, 0.0
      %v664 = vmax.f32 %v584, 0.0
      %v665 = vmax.f32 %v589, 0.0
      %v666 = vmax.f32 %v592, 0.0
      %v667 = vmax.f32 %v597, 0.0
      %v668 = vmax.f32 %v600, 0.0
      %v669 = vmax.f32 %v605, 0.0
      %v670 = vmax.f32 %v608, 0.0
      %v671 = vmax.f32 %v613, 0.0
      %v672 = vmax.f32 %v616, 0.0
      %v673 = vmax.f32 %v621, 0.0
      %v674 = vmax.f32 %v624, 0.0
      %v675 = vpack.c.bf16 %v640, %v639
      %v676 = vpack.c.bf16 %v642, %v641
      %v677 = vpack.c.bf16 %v644, %v643
      %v678 = vpack.c.bf16 %v646, %v645
      %v679 = vpack.c.bf16 %v648, %v647
      %v680 = vpack.c.bf16 %v650, %v649
      %v681 = vpack.c.bf16 %v652, %v651
      %v682 = vpack.c.bf16 %v654, %v653
      %v683 = vpack.c.bf16 %v656, %v655
      %v684 = vpack.c.bf16 %v658, %v657
      %v685 = vpack.c.bf16 %v660, %v659
      %v686 = vpack.c.bf16 %v662, %v661
      %v687 = vpack.c.bf16 %v664, %v663
      %v688 = vpack.c.bf16 %v666, %v665
      %v689 = vpack.c.bf16 %v668, %v667
      %v690 = vpack.c.bf16 %v670, %v669
      %v691 = vpack.c.bf16 %v672, %v671
      %v692 = vpack.c.bf16 %v674, %v673
      %v693 = vld [vmem:[%s2] sm:$0xf]
      %v694 = vld [vmem:[%s2 + $0x4] sm:$0xf]
      %v695 = vld [vmem:[%s2 + $0x8] sm:$0xf]
      %v696 = vld [vmem:[%s2 + $0xc] sm:$0xf]
      %v697 = vld [vmem:[%s2 + $0x10] sm:$0xf]
      %v698 = vld [vmem:[%s2 + $0x14] sm:$0xf]
      %v699 = vld [vmem:[%s2 + $0x18] sm:$0xf]
      %v700 = vld [vmem:[%s2 + $0x1c] sm:$0xf]
      %v701 = vld [vmem:[%s2 + $0x20] sm:$0xf]
      %v702 = vld [vmem:[%s2 + $0x24] sm:$0xf]
      %v703 = vld [vmem:[%s2 + $0x28] sm:$0xf]
      %v704 = vld [vmem:[%s2 + $0x2c] sm:$0xf]
      %v705 = vld [vmem:[%s2 + $0x30] sm:$0xf]
      %v706 = vld [vmem:[%s2 + $0x34] sm:$0xf]
      %v707 = vld [vmem:[%s2 + $0x38] sm:$0xf]
      %v708 = vld [vmem:[%s2 + $0x3c] sm:$0xf]
      %s709 = scalar_lea.vmem %s2, 64
      %v710 = vld [vmem:[%s709] sm:$0xf]
      %v711 = vld [vmem:[%s709 + $0x4] sm:$0xf]
      %v712 = vld [vmem:[%s709 + $0x8] sm:$0xf]
      %v713 = vld [vmem:[%s709 + $0xc] sm:$0xf]
      %v714 = vld [vmem:[%s709 + $0x10] sm:$0xf]
      %v715 = vld [vmem:[%s709 + $0x14] sm:$0xf]
      %v716 = vld [vmem:[%s709 + $0x18] sm:$0xf]
      %v717 = vld [vmem:[%s709 + $0x1c] sm:$0xf]
      %v718 = vld [vmem:[%s709 + $0x20] sm:$0xf]
      %v719 = vld [vmem:[%s709 + $0x24] sm:$0xf]
      %v720 = vld [vmem:[%s709 + $0x28] sm:$0xf]
      %v721 = vld [vmem:[%s709 + $0x2c] sm:$0xf]
      %v722 = vld [vmem:[%s709 + $0x30] sm:$0xf]
      %v723 = vld [vmem:[%s709 + $0x34] sm:$0xf]
      %v724 = vld [vmem:[%s709 + $0x38] sm:$0xf]
      %v725 = vld [vmem:[%s709 + $0x3c] sm:$0xf]
      %v730 = vunpack.c.l.b16 %v676
      %v731 = vunpack.c.l.b16 %v678
      %v732 = vunpack.c.l.b16 %v680
      %v733 = vunpack.c.l.b16 %v682
      %v734 = vpack.c.b16 %v731, %v730
      %v735 = vpack.c.b16 %v733, %v732
      %v754 = vunpack.c.l.b16 %v710
      %v755 = vunpack.c.l.b16 %v711
      %v756 = vunpack.c.l.b16 %v712
      %v757 = vunpack.c.l.b16 %v713
      %v758 = vunpack.c.l.b16 %v714
      %v759 = vunpack.c.l.b16 %v715
      %v760 = vunpack.c.l.b16 %v716
      %v761 = vunpack.c.l.b16 %v717
      %v762 = vunpack.c.l.b16 %v718
      %v763 = vunpack.c.l.b16 %v719
      %v764 = vunpack.c.l.b16 %v720
      %v765 = vunpack.c.l.b16 %v721
      %v766 = vunpack.c.l.b16 %v722
      %v767 = vunpack.c.l.b16 %v723
      %v768 = vunpack.c.l.b16 %v724
      %v769 = vunpack.c.l.b16 %v725
      %v770 = vpack.c.b16 %v755, %v754
      %v771 = vpack.c.b16 %v757, %v756
      %v772 = vpack.c.b16 %v759, %v758
      %v773 = vpack.c.b16 %v761, %v760
      %v774 = vpack.c.b16 %v763, %v762
      %v775 = vpack.c.b16 %v765, %v764
      %v776 = vpack.c.b16 %v767, %v766
      %v777 = vpack.c.b16 %v769, %v768
      %786 = vmatprep.subr.bf16.mxu0 0
      %787 = vmatpush1.bf16.msra.mxu0 %v770
      %788 = vmatprep.subr.bf16.mxu0 0
      %789 = vmatpush1.bf16.msra.mxu0 %v771
      %790 = vmatprep.subr.bf16.mxu0 0
      %791 = vmatpush1.bf16.msra.mxu0 %v772
      %792 = vmatprep.subr.bf16.mxu0 0
      %793 = vmatpush1.bf16.msra.mxu0 %v773
      %794 = vmatprep.subr.bf16.mxu0 0
      %795 = vmatpush1.bf16.msra.mxu0 %v774
      %796 = vmatprep.subr.bf16.mxu0 0
      %797 = vmatpush1.bf16.msra.mxu0 %v775
      %798 = vmatprep.subr.bf16.mxu0 0
      %799 = vmatpush1.bf16.msra.mxu0 %v776
      %800 = vmatprep.subr.bf16.mxu0 0
      %801 = vmatpush1.bf16.msra.mxu0 %v777
      %802 = vmatprep.subr.bf16.mxu0 0
      %803 = vmatpush1.bf16.msra.mxu0 0
      %804 = vmatprep.subr.bf16.mxu0 0
      %805 = vmatpush1.bf16.msra.mxu0 0
      %806 = vmatprep.subr.bf16.mxu0 0
      %807 = vmatpush1.bf16.msra.mxu0 0
      %808 = vmatprep.subr.bf16.mxu0 0
      %809 = vmatpush1.bf16.msra.mxu0 0
      %810 = vmatprep.subr.bf16.mxu0 0
      %811 = vmatpush1.bf16.msra.mxu0 0
      %812 = vmatprep.subr.bf16.mxu0 0
      %813 = vmatpush1.bf16.msra.mxu0 0
      %814 = vmatprep.subr.bf16.mxu0 0
      %815 = vmatpush1.bf16.msra.mxu0 0
      %816 = vmatprep.subr.bf16.mxu0 0
      %817 = vmatpush1.bf16.msra.mxu0 0
      %818 = vmatprep.mubr.bf16.mxu0 0
      %819 = vmatmul.mubr.bf16.gmra.mrb[0].mxu0 %v734
      %v820 = vpop.f32.mrb[0].mxu0
      %v821 = vadd.f32 0.0, %v820
      %v822 = vpop.f32.mrb[0].mxu0
      %v823 = vpop.f32.mrb[0].mxu0
      %v824 = vadd.f32 0.0, %v823
      %v825 = vpop.f32.mrb[0].mxu0
      %826 = vmatprep.mubr.bf16.mxu0 0
      %827 = vmatmul.mubr.bf16.gmra.mrb[0].mxu0 %v735
      %v828 = vpop.f32.mrb[0].mxu0
      %v829 = vadd.f32 0.0, %v828
      %v830 = vpop.f32.mrb[0].mxu0
      %v831 = vpop.f32.mrb[0].mxu0
      %v832 = vadd.f32 0.0, %v831
      %v833 = vpop.f32.mrb[0].mxu0
      %834 = vdwg.mxu0
      %v839 = vunpack.c.l.b16 %v675
      %v840 = vunpack.c.l.b16 %v677
      %v841 = vunpack.c.l.b16 %v679
      %v842 = vunpack.c.l.b16 %v681
      %v843 = vpack.c.b16 %v840, %v839
      %v844 = vpack.c.b16 %v842, %v841
      %v863 = vunpack.c.l.b16 %v693
      %v864 = vunpack.c.l.b16 %v694
      %v865 = vunpack.c.l.b16 %v695
      %v866 = vunpack.c.l.b16 %v696
      %v867 = vunpack.c.l.b16 %v697
      %v868 = vunpack.c.l.b16 %v698
      %v869 = vunpack.c.l.b16 %v699
      %v870 = vunpack.c.l.b16 %v700
      %v871 = vunpack.c.l.b16 %v701
      %v872 = vunpack.c.l.b16 %v702
      %v873 = vunpack.c.l.b16 %v703
      %v874 = vunpack.c.l.b16 %v704
      %v875 = vunpack.c.l.b16 %v705
      %v876 = vunpack.c.l.b16 %v706
      %v877 = vunpack.c.l.b16 %v707
      %v878 = vunpack.c.l.b16 %v708
      %v879 = vpack.c.b16 %v864, %v863
      %v880 = vpack.c.b16 %v866, %v865
      %v881 = vpack.c.b16 %v868, %v867
      %v882 = vpack.c.b16 %v870, %v869
      %v883 = vpack.c.b16 %v872, %v871
      %v884 = vpack.c.b16 %v874, %v873
      %v885 = vpack.c.b16 %v876, %v875
      %v886 = vpack.c.b16 %v878, %v877
      %895 = vmatprep.subr.bf16.mxu0 0
      %896 = vmatpush1.bf16.msra.mxu0 %v879
      %897 = vmatprep.subr.bf16.mxu0 0
      %898 = vmatpush1.bf16.msra.mxu0 %v880
      %899 = vmatprep.subr.bf16.mxu0 0
      %900 = vmatpush1.bf16.msra.mxu0 %v881
      %901 = vmatprep.subr.bf16.mxu0 0
      %902 = vmatpush1.bf16.msra.mxu0 %v882
      %903 = vmatprep.subr.bf16.mxu0 0
      %904 = vmatpush1.bf16.msra.mxu0 %v883
      %905 = vmatprep.subr.bf16.mxu0 0
      %906 = vmatpush1.bf16.msra.mxu0 %v884
      %907 = vmatprep.subr.bf16.mxu0 0
      %908 = vmatpush1.bf16.msra.mxu0 %v885
      %909 = vmatprep.subr.bf16.mxu0 0
      %910 = vmatpush1.bf16.msra.mxu0 %v886
      %911 = vmatprep.subr.bf16.mxu0 0
      %912 = vmatpush1.bf16.msra.mxu0 0
      %913 = vmatprep.subr.bf16.mxu0 0
      %914 = vmatpush1.bf16.msra.mxu0 0
      %915 = vmatprep.subr.bf16.mxu0 0
      %916 = vmatpush1.bf16.msra.mxu0 0
      %917 = vmatprep.subr.bf16.mxu0 0
      %918 = vmatpush1.bf16.msra.mxu0 0
      %919 = vmatprep.subr.bf16.mxu0 0
      %920 = vmatpush1.bf16.msra.mxu0 0
      %921 = vmatprep.subr.bf16.mxu0 0
      %922 = vmatpush1.bf16.msra.mxu0 0
      %923 = vmatprep.subr.bf16.mxu0 0
      %924 = vmatpush1.bf16.msra.mxu0 0
      %925 = vmatprep.subr.bf16.mxu0 0
      %926 = vmatpush1.bf16.msra.mxu0 0
      %927 = vmatprep.mubr.bf16.mxu0 0
      %928 = vmatmul.mubr.bf16.gmra.mrb[0].mxu0 %v843
      %v929 = vpop.f32.mrb[0].mxu0
      %v930 = vadd.f32 %v821, %v929
      %v931 = vpop.f32.mrb[0].mxu0
      %v932 = vpop.f32.mrb[0].mxu0
      %v933 = vadd.f32 %v824, %v932
      %v934 = vpop.f32.mrb[0].mxu0
      %935 = vmatprep.mubr.bf16.mxu0 0
      %936 = vmatmul.mubr.bf16.gmra.mrb[0].mxu0 %v844
      %v937 = vpop.f32.mrb[0].mxu0
      %v938 = vadd.f32 %v829, %v937
      %v939 = vpop.f32.mrb[0].mxu0
      %v940 = vpop.f32.mrb[0].mxu0
      %v941 = vadd.f32 %v832, %v940
      %v942 = vpop.f32.mrb[0].mxu0
      %943 = vdwg.mxu0
      %v944 = vunpack.c.h.b16 %v675
      %v945 = vunpack.c.h.b16 %v677
      %v946 = vunpack.c.h.b16 %v679
      %v947 = vunpack.c.h.b16 %v681
      %v948 = vpack.c.b16 %v839, %v839
      %v949 = vpack.c.b16 %v944, %v944
      %v950 = vpack.c.b16 %v840, %v840
      %v951 = vpack.c.b16 %v945, %v945
      %v952 = vpack.c.b16 %v841, %v841
      %v953 = vpack.c.b16 %v946, %v946
      %v954 = vpack.c.b16 %v842, %v842
      %v955 = vpack.c.b16 %v947, %v947
      %vm956 = vsmask.f32 3328
      %vm957 = vsmask.f32 7440
      %vm958 = vmor %vm956, %vm957
      %v960 = vshrl.u32 %v948, 16
      %v962 = vrot.slane %v960, 4
      %v963 = vshll.u32 %v948, 16
      %v965 = vrot.slane %v963, 5
      %v966 = vor.u32 %v962, %v965
      %v967 = vrot.slane %v966, 4
      %v969 = vshll.u32 %v949, 16
      %v971 = vrot.slane %v969, 5
      %v972 = vsel %vm958, %v967, %v971
      %v974 = vshrl.u32 %v950, 16
      %v976 = vrot.slane %v974, 4
      %v977 = vshll.u32 %v950, 16
      %v979 = vrot.slane %v977, 5
      %v980 = vor.u32 %v976, %v979
      %v981 = vrot.slane %v980, 4
      %v983 = vshll.u32 %v951, 16
      %v985 = vrot.slane %v983, 5
      %v986 = vsel %vm958, %v981, %v985
      %v988 = vshrl.u32 %v952, 16
      %v990 = vrot.slane %v988, 4
      %v991 = vshll.u32 %v952, 16
      %v993 = vrot.slane %v991, 5
      %v994 = vor.u32 %v990, %v993
      %v995 = vrot.slane %v994, 4
      %v997 = vshll.u32 %v953, 16
      %v999 = vrot.slane %v997, 5
      %v1000 = vsel %vm958, %v995, %v999
      %v1002 = vshrl.u32 %v954, 16
      %v1004 = vrot.slane %v1002, 4
      %v1005 = vshll.u32 %v954, 16
      %v1007 = vrot.slane %v1005, 5
      %v1008 = vor.u32 %v1004, %v1007
      %v1009 = vrot.slane %v1008, 4
      %v1011 = vshll.u32 %v955, 16
      %v1013 = vrot.slane %v1011, 5
      %v1014 = vsel %vm958, %v1009, %v1013
      %s1015 = scalar_lea.vmem %s2, 128
      %v1016 = vld [vmem:[%s1015] sm:$0xf]
      %v1017 = vld [vmem:[%s1015 + $0x4] sm:$0xf]
      %v1018 = vld [vmem:[%s1015 + $0x8] sm:$0xf]
      %v1019 = vld [vmem:[%s1015 + $0xc] sm:$0xf]
      %v1020 = vld [vmem:[%s1015 + $0x10] sm:$0xf]
      %v1021 = vld [vmem:[%s1015 + $0x14] sm:$0xf]
      %v1022 = vld [vmem:[%s1015 + $0x18] sm:$0xf]
      %v1023 = vld [vmem:[%s1015 + $0x1c] sm:$0xf]
      %v1024 = vld [vmem:[%s1015 + $0x20] sm:$0xf]
      %v1025 = vld [vmem:[%s1015 + $0x24] sm:$0xf]
      %v1026 = vld [vmem:[%s1015 + $0x28] sm:$0xf]
      %v1027 = vld [vmem:[%s1015 + $0x2c] sm:$0xf]
      %v1028 = vld [vmem:[%s1015 + $0x30] sm:$0xf]
      %v1029 = vld [vmem:[%s1015 + $0x34] sm:$0xf]
      %v1030 = vld [vmem:[%s1015 + $0x38] sm:$0xf]
      %v1031 = vld [vmem:[%s1015 + $0x3c] sm:$0xf]
      %v1032 = vunpack.c.l.b16 %v972
      %v1033 = vunpack.c.l.b16 %v986
      %v1034 = vunpack.c.l.b16 %v1000
      %v1035 = vunpack.c.l.b16 %v1014
      %v1036 = vpack.c.b16 %v1033, %v1032
      %v1037 = vpack.c.b16 %v1035, %v1034
      %v1056 = vunpack.c.l.b16 %v1016
      %v1057 = vunpack.c.l.b16 %v1017
      %v1058 = vunpack.c.l.b16 %v1018
      %v1059 = vunpack.c.l.b16 %v1019
      %v1060 = vunpack.c.l.b16 %v1020
      %v1061 = vunpack.c.l.b16 %v1021
      %v1062 = vunpack.c.l.b16 %v1022
      %v1063 = vunpack.c.l.b16 %v1023
      %v1064 = vunpack.c.l.b16 %v1024
      %v1065 = vunpack.c.l.b16 %v1025
      %v1066 = vunpack.c.l.b16 %v1026
      %v1067 = vunpack.c.l.b16 %v1027
      %v1068 = vunpack.c.l.b16 %v1028
      %v1069 = vunpack.c.l.b16 %v1029
      %v1070 = vunpack.c.l.b16 %v1030
      %v1071 = vunpack.c.l.b16 %v1031
      %v1072 = vpack.c.b16 %v1057, %v1056
      %v1073 = vpack.c.b16 %v1059, %v1058
      %v1074 = vpack.c.b16 %v1061, %v1060
      %v1075 = vpack.c.b16 %v1063, %v1062
      %v1076 = vpack.c.b16 %v1065, %v1064
      %v1077 = vpack.c.b16 %v1067, %v1066
      %v1078 = vpack.c.b16 %v1069, %v1068
      %v1079 = vpack.c.b16 %v1071, %v1070
      %1088 = vmatprep.subr.bf16.mxu0 0
      %1089 = vmatpush1.bf16.msra.mxu0 %v1072
      %1090 = vmatprep.subr.bf16.mxu0 0
      %1091 = vmatpush1.bf16.msra.mxu0 %v1073
      %1092 = vmatprep.subr.bf16.mxu0 0
      %1093 = vmatpush1.bf16.msra.mxu0 %v1074
      %1094 = vmatprep.subr.bf16.mxu0 0
      %1095 = vmatpush1.bf16.msra.mxu0 %v1075
      %1096 = vmatprep.subr.bf16.mxu0 0
      %1097 = vmatpush1.bf16.msra.mxu0 %v1076
      %1098 = vmatprep.subr.bf16.mxu0 0
      %1099 = vmatpush1.bf16.msra.mxu0 %v1077
      %1100 = vmatprep.subr.bf16.mxu0 0
      %1101 = vmatpush1.bf16.msra.mxu0 %v1078
      %1102 = vmatprep.subr.bf16.mxu0 0
      %1103 = vmatpush1.bf16.msra.mxu0 %v1079
      %1104 = vmatprep.subr.bf16.mxu0 0
      %1105 = vmatpush1.bf16.msra.mxu0 0
      %1106 = vmatprep.subr.bf16.mxu0 0
      %1107 = vmatpush1.bf16.msra.mxu0 0
      %1108 = vmatprep.subr.bf16.mxu0 0
      %1109 = vmatpush1.bf16.msra.mxu0 0
      %1110 = vmatprep.subr.bf16.mxu0 0
      %1111 = vmatpush1.bf16.msra.mxu0 0
      %1112 = vmatprep.subr.bf16.mxu0 0
      %1113 = vmatpush1.bf16.msra.mxu0 0
      %1114 = vmatprep.subr.bf16.mxu0 0
      %1115 = vmatpush1.bf16.msra.mxu0 0
      %1116 = vmatprep.subr.bf16.mxu0 0
      %1117 = vmatpush1.bf16.msra.mxu0 0
      %1118 = vmatprep.subr.bf16.mxu0 0
      %1119 = vmatpush1.bf16.msra.mxu0 0
      %1120 = vmatprep.mubr.bf16.mxu0 0
      %1121 = vmatmul.mubr.bf16.gmra.mrb[0].mxu0 %v1036
      %v1122 = vpop.f32.mrb[0].mxu0
      %v1123 = vadd.f32 0.0, %v1122
      %v1124 = vpop.f32.mrb[0].mxu0
      %v1125 = vpop.f32.mrb[0].mxu0
      %v1126 = vadd.f32 0.0, %v1125
      %v1127 = vpop.f32.mrb[0].mxu0
      %1128 = vmatprep.mubr.bf16.mxu0 0
      %1129 = vmatmul.mubr.bf16.gmra.mrb[0].mxu0 %v1037
      %v1130 = vpop.f32.mrb[0].mxu0
      %v1131 = vadd.f32 0.0, %v1130
      %v1132 = vpop.f32.mrb[0].mxu0
      %v1133 = vpop.f32.mrb[0].mxu0
      %v1134 = vadd.f32 0.0, %v1133
      %v1135 = vpop.f32.mrb[0].mxu0
      %1136 = vdwg.mxu0
      %v1137 = vadd.f32 %v930, %v1123
      %v1138 = vadd.f32 %v933, %v1126
      %v1139 = vadd.f32 %v938, %v1131
      %v1140 = vadd.f32 %v941, %v1134
      %s1141 = scalar_lea.vmem %s2, 192
      %v1142 = vld [vmem:[%s1141] sm:$0xf]
      %v1143 = vld [vmem:[%s1141 + $0x4] sm:$0xf]
      %v1144 = vld [vmem:[%s1141 + $0x8] sm:$0xf]
      %v1145 = vld [vmem:[%s1141 + $0xc] sm:$0xf]
      %v1146 = vld [vmem:[%s1141 + $0x10] sm:$0xf]
      %v1147 = vld [vmem:[%s1141 + $0x14] sm:$0xf]
      %v1148 = vld [vmem:[%s1141 + $0x18] sm:$0xf]
      %v1149 = vld [vmem:[%s1141 + $0x1c] sm:$0xf]
      %v1150 = vld [vmem:[%s1141 + $0x20] sm:$0xf]
      %v1151 = vld [vmem:[%s1141 + $0x24] sm:$0xf]
      %v1152 = vld [vmem:[%s1141 + $0x28] sm:$0xf]
      %v1153 = vld [vmem:[%s1141 + $0x2c] sm:$0xf]
      %v1154 = vld [vmem:[%s1141 + $0x30] sm:$0xf]
      %v1155 = vld [vmem:[%s1141 + $0x34] sm:$0xf]
      %v1156 = vld [vmem:[%s1141 + $0x38] sm:$0xf]
      %v1157 = vld [vmem:[%s1141 + $0x3c] sm:$0xf]
      %v1162 = vunpack.c.l.b16 %v685
      %v1163 = vunpack.c.l.b16 %v687
      %v1164 = vunpack.c.l.b16 %v689
      %v1165 = vunpack.c.l.b16 %v691
      %v1166 = vpack.c.b16 %v1163, %v1162
      %v1167 = vpack.c.b16 %v1165, %v1164
      %v1186 = vunpack.c.l.b16 %v1142
      %v1187 = vunpack.c.l.b16 %v1143
      %v1188 = vunpack.c.l.b16 %v1144
      %v1189 = vunpack.c.l.b16 %v1145
      %v1190 = vunpack.c.l.b16 %v1146
      %v1191 = vunpack.c.l.b16 %v1147
      %v1192 = vunpack.c.l.b16 %v1148
      %v1193 = vunpack.c.l.b16 %v1149
      %v1194 = vunpack.c.l.b16 %v1150
      %v1195 = vunpack.c.l.b16 %v1151
      %v1196 = vunpack.c.l.b16 %v1152
      %v1197 = vunpack.c.l.b16 %v1153
      %v1198 = vunpack.c.l.b16 %v1154
      %v1199 = vunpack.c.l.b16 %v1155
      %v1200 = vunpack.c.l.b16 %v1156
      %v1201 = vunpack.c.l.b16 %v1157
      %v1202 = vpack.c.b16 %v1187, %v1186
      %v1203 = vpack.c.b16 %v1189, %v1188
      %v1204 = vpack.c.b16 %v1191, %v1190
      %v1205 = vpack.c.b16 %v1193, %v1192
      %v1206 = vpack.c.b16 %v1195, %v1194
      %v1207 = vpack.c.b16 %v1197, %v1196
      %v1208 = vpack.c.b16 %v1199, %v1198
      %v1209 = vpack.c.b16 %v1201, %v1200
      %1218 = vmatprep.subr.bf16.mxu0 0
      %1219 = vmatpush1.bf16.msra.mxu0 %v1202
      %1220 = vmatprep.subr.bf16.mxu0 0
      %1221 = vmatpush1.bf16.msra.mxu0 %v1203
      %1222 = vmatprep.subr.bf16.mxu0 0
      %1223 = vmatpush1.bf16.msra.mxu0 %v1204
      %1224 = vmatprep.subr.bf16.mxu0 0
      %1225 = vmatpush1.bf16.msra.mxu0 %v1205
      %1226 = vmatprep.subr.bf16.mxu0 0
      %1227 = vmatpush1.bf16.msra.mxu0 %v1206
      %1228 = vmatprep.subr.bf16.mxu0 0
      %1229 = vmatpush1.bf16.msra.mxu0 %v1207
      %1230 = vmatprep.subr.bf16.mxu0 0
      %1231 = vmatpush1.bf16.msra.mxu0 %v1208
      %1232 = vmatprep.subr.bf16.mxu0 0
      %1233 = vmatpush1.bf16.msra.mxu0 %v1209
      %1234 = vmatprep.subr.bf16.mxu0 0
      %1235 = vmatpush1.bf16.msra.mxu0 0
      %1236 = vmatprep.subr.bf16.mxu0 0
      %1237 = vmatpush1.bf16.msra.mxu0 0
      %1238 = vmatprep.subr.bf16.mxu0 0
      %1239 = vmatpush1.bf16.msra.mxu0 0
      %1240 = vmatprep.subr.bf16.mxu0 0
      %1241 = vmatpush1.bf16.msra.mxu0 0
      %1242 = vmatprep.subr.bf16.mxu0 0
      %1243 = vmatpush1.bf16.msra.mxu0 0
      %1244 = vmatprep.subr.bf16.mxu0 0
      %1245 = vmatpush1.bf16.msra.mxu0 0
      %1246 = vmatprep.subr.bf16.mxu0 0
      %1247 = vmatpush1.bf16.msra.mxu0 0
      %1248 = vmatprep.subr.bf16.mxu0 0
      %1249 = vmatpush1.bf16.msra.mxu0 0
      %1250 = vmatprep.mubr.bf16.mxu0 0
      %1251 = vmatmul.mubr.bf16.gmra.mrb[0].mxu0 %v1166
      %v1252 = vpop.f32.mrb[0].mxu0
      %v1253 = vadd.f32 0.0, %v1252
      %v1254 = vpop.f32.mrb[0].mxu0
      %v1255 = vpop.f32.mrb[0].mxu0
      %v1256 = vadd.f32 0.0, %v1255
      %v1257 = vpop.f32.mrb[0].mxu0
      %1258 = vmatprep.mubr.bf16.mxu0 0
      %1259 = vmatmul.mubr.bf16.gmra.mrb[0].mxu0 %v1167
      %v1260 = vpop.f32.mrb[0].mxu0
      %v1261 = vadd.f32 0.0, %v1260
      %v1262 = vpop.f32.mrb[0].mxu0
      %v1263 = vpop.f32.mrb[0].mxu0
      %v1264 = vadd.f32 0.0, %v1263
      %v1265 = vpop.f32.mrb[0].mxu0
      %1266 = vdwg.mxu0
      %v1267 = vadd.f32 %v1137, %v1253
      %v1268 = vadd.f32 %v1138, %v1256
      %v1269 = vadd.f32 %v1139, %v1261
      %v1270 = vadd.f32 %v1140, %v1264
      %s1271 = scalar_lea.vmem %s2, 256
      %v1272 = vld [vmem:[%s1271] sm:$0xf]
      %v1273 = vld [vmem:[%s1271 + $0x4] sm:$0xf]
      %v1274 = vld [vmem:[%s1271 + $0x8] sm:$0xf]
      %v1275 = vld [vmem:[%s1271 + $0xc] sm:$0xf]
      %v1276 = vld [vmem:[%s1271 + $0x10] sm:$0xf]
      %v1277 = vld [vmem:[%s1271 + $0x14] sm:$0xf]
      %v1278 = vld [vmem:[%s1271 + $0x18] sm:$0xf]
      %v1279 = vld [vmem:[%s1271 + $0x1c] sm:$0xf]
      %v1280 = vld [vmem:[%s1271 + $0x20] sm:$0xf]
      %v1281 = vld [vmem:[%s1271 + $0x24] sm:$0xf]
      %v1282 = vld [vmem:[%s1271 + $0x28] sm:$0xf]
      %v1283 = vld [vmem:[%s1271 + $0x2c] sm:$0xf]
      %v1284 = vld [vmem:[%s1271 + $0x30] sm:$0xf]
      %v1285 = vld [vmem:[%s1271 + $0x34] sm:$0xf]
      %v1286 = vld [vmem:[%s1271 + $0x38] sm:$0xf]
      %v1287 = vld [vmem:[%s1271 + $0x3c] sm:$0xf]
      %v1292 = vunpack.c.l.b16 %v686
      %v1293 = vunpack.c.l.b16 %v688
      %v1294 = vunpack.c.l.b16 %v690
      %v1295 = vunpack.c.l.b16 %v692
      %v1296 = vpack.c.b16 %v1293, %v1292
      %v1297 = vpack.c.b16 %v1295, %v1294
      %v1316 = vunpack.c.l.b16 %v1272
      %v1317 = vunpack.c.l.b16 %v1273
      %v1318 = vunpack.c.l.b16 %v1274
      %v1319 = vunpack.c.l.b16 %v1275
      %v1320 = vunpack.c.l.b16 %v1276
      %v1321 = vunpack.c.l.b16 %v1277
      %v1322 = vunpack.c.l.b16 %v1278
      %v1323 = vunpack.c.l.b16 %v1279
      %v1324 = vunpack.c.l.b16 %v1280
      %v1325 = vunpack.c.l.b16 %v1281
      %v1326 = vunpack.c.l.b16 %v1282
      %v1327 = vunpack.c.l.b16 %v1283
      %v1328 = vunpack.c.l.b16 %v1284
      %v1329 = vunpack.c.l.b16 %v1285
      %v1330 = vunpack.c.l.b16 %v1286
      %v1331 = vunpack.c.l.b16 %v1287
      %v1332 = vpack.c.b16 %v1317, %v1316
      %v1333 = vpack.c.b16 %v1319, %v1318
      %v1334 = vpack.c.b16 %v1321, %v1320
      %v1335 = vpack.c.b16 %v1323, %v1322
      %v1336 = vpack.c.b16 %v1325, %v1324
      %v1337 = vpack.c.b16 %v1327, %v1326
      %v1338 = vpack.c.b16 %v1329, %v1328
      %v1339 = vpack.c.b16 %v1331, %v1330
      %1348 = vmatprep.subr.bf16.mxu0 0
      %1349 = vmatpush1.bf16.msra.mxu0 %v1332
      %1350 = vmatprep.subr.bf16.mxu0 0
      %1351 = vmatpush1.bf16.msra.mxu0 %v1333
      %1352 = vmatprep.subr.bf16.mxu0 0
      %1353 = vmatpush1.bf16.msra.mxu0 %v1334
      %1354 = vmatprep.subr.bf16.mxu0 0
      %1355 = vmatpush1.bf16.msra.mxu0 %v1335
      %1356 = vmatprep.subr.bf16.mxu0 0
      %1357 = vmatpush1.bf16.msra.mxu0 %v1336
      %1358 = vmatprep.subr.bf16.mxu0 0
      %1359 = vmatpush1.bf16.msra.mxu0 %v1337
      %1360 = vmatprep.subr.bf16.mxu0 0
      %1361 = vmatpush1.bf16.msra.mxu0 %v1338
      %1362 = vmatprep.subr.bf16.mxu0 0
      %1363 = vmatpush1.bf16.msra.mxu0 %v1339
      %1364 = vmatprep.subr.bf16.mxu0 0
      %1365 = vmatpush1.bf16.msra.mxu0 0
      %1366 = vmatprep.subr.bf16.mxu0 0
      %1367 = vmatpush1.bf16.msra.mxu0 0
      %1368 = vmatprep.subr.bf16.mxu0 0
      %1369 = vmatpush1.bf16.msra.mxu0 0
      %1370 = vmatprep.subr.bf16.mxu0 0
      %1371 = vmatpush1.bf16.msra.mxu0 0
      %1372 = vmatprep.subr.bf16.mxu0 0
      %1373 = vmatpush1.bf16.msra.mxu0 0
      %1374 = vmatprep.subr.bf16.mxu0 0
      %1375 = vmatpush1.bf16.msra.mxu0 0
      %1376 = vmatprep.subr.bf16.mxu0 0
      %1377 = vmatpush1.bf16.msra.mxu0 0
      %1378 = vmatprep.subr.bf16.mxu0 0
      %1379 = vmatpush1.bf16.msra.mxu0 0
      %1380 = vmatprep.mubr.bf16.mxu0 0
      %1381 = vmatmul.mubr.bf16.gmra.mrb[0].mxu0 %v1296
      %v1382 = vpop.f32.mrb[0].mxu0
      %v1383 = vadd.f32 0.0, %v1382
      %v1384 = vpop.f32.mrb[0].mxu0
      %v1385 = vpop.f32.mrb[0].mxu0
      %v1386 = vadd.f32 0.0, %v1385
      %v1387 = vpop.f32.mrb[0].mxu0
      %1388 = vmatprep.mubr.bf16.mxu0 0
      %1389 = vmatmul.mubr.bf16.gmra.mrb[0].mxu0 %v1297
      %v1390 = vpop.f32.mrb[0].mxu0
      %v1391 = vadd.f32 0.0, %v1390
      %v1392 = vpop.f32.mrb[0].mxu0
      %v1393 = vpop.f32.mrb[0].mxu0
      %v1394 = vadd.f32 0.0, %v1393
      %v1395 = vpop.f32.mrb[0].mxu0
      %1396 = vdwg.mxu0
      %v1397 = vadd.f32 %v1267, %v1383
      %v1398 = vadd.f32 %v1268, %v1386
      %v1399 = vadd.f32 %v1269, %v1391
      %v1400 = vadd.f32 %v1270, %v1394
      %v1401 = vunpack.c.h.b16 %v685
      %v1402 = vunpack.c.h.b16 %v687
      %v1403 = vunpack.c.h.b16 %v689
      %v1404 = vunpack.c.h.b16 %v691
      %v1405 = vpack.c.b16 %v1162, %v1162
      %v1406 = vpack.c.b16 %v1401, %v1401
      %v1407 = vpack.c.b16 %v1163, %v1163
      %v1408 = vpack.c.b16 %v1402, %v1402
      %v1409 = vpack.c.b16 %v1164, %v1164
      %v1410 = vpack.c.b16 %v1403, %v1403
      %v1411 = vpack.c.b16 %v1165, %v1165
      %v1412 = vpack.c.b16 %v1404, %v1404
      %v1414 = vshrl.u32 %v1405, 16
      %v1416 = vrot.slane %v1414, 4
      %v1417 = vshll.u32 %v1405, 16
      %v1419 = vrot.slane %v1417, 5
      %v1420 = vor.u32 %v1416, %v1419
      %v1421 = vrot.slane %v1420, 4
      %v1423 = vshll.u32 %v1406, 16
      %v1425 = vrot.slane %v1423, 5
      %v1426 = vsel %vm958, %v1421, %v1425
      %v1428 = vshrl.u32 %v1407, 16
      %v1430 = vrot.slane %v1428, 4
      %v1431 = vshll.u32 %v1407, 16
      %v1433 = vrot.slane %v1431, 5
      %v1434 = vor.u32 %v1430, %v1433
      %v1435 = vrot.slane %v1434, 4
      %v1437 = vshll.u32 %v1408, 16
      %v1439 = vrot.slane %v1437, 5
      %v1440 = vsel %vm958, %v1435, %v1439
      %v1442 = vshrl.u32 %v1409, 16
      %v1444 = vrot.slane %v1442, 4
      %v1445 = vshll.u32 %v1409, 16
      %v1447 = vrot.slane %v1445, 5
      %v1448 = vor.u32 %v1444, %v1447
      %v1449 = vrot.slane %v1448, 4
      %v1451 = vshll.u32 %v1410, 16
      %v1453 = vrot.slane %v1451, 5
      %v1454 = vsel %vm958, %v1449, %v1453
      %v1456 = vshrl.u32 %v1411, 16
      %v1458 = vrot.slane %v1456, 4
      %v1459 = vshll.u32 %v1411, 16
      %v1461 = vrot.slane %v1459, 5
      %v1462 = vor.u32 %v1458, %v1461
      %v1463 = vrot.slane %v1462, 4
      %v1465 = vshll.u32 %v1412, 16
      %v1467 = vrot.slane %v1465, 5
      %v1468 = vsel %vm958, %v1463, %v1467
      %s1469 = scalar_lea.vmem %s2, 320
      %v1470 = vld [vmem:[%s1469] sm:$0xf]
      %v1471 = vld [vmem:[%s1469 + $0x4] sm:$0xf]
      %v1472 = vld [vmem:[%s1469 + $0x8] sm:$0xf]
      %v1473 = vld [vmem:[%s1469 + $0xc] sm:$0xf]
      %v1474 = vld [vmem:[%s1469 + $0x10] sm:$0xf]
      %v1475 = vld [vmem:[%s1469 + $0x14] sm:$0xf]
      %v1476 = vld [vmem:[%s1469 + $0x18] sm:$0xf]
      %v1477 = vld [vmem:[%s1469 + $0x1c] sm:$0xf]
      %v1478 = vld [vmem:[%s1469 + $0x20] sm:$0xf]
      %v1479 = vld [vmem:[%s1469 + $0x24] sm:$0xf]
      %v1480 = vld [vmem:[%s1469 + $0x28] sm:$0xf]
      %v1481 = vld [vmem:[%s1469 + $0x2c] sm:$0xf]
      %v1482 = vld [vmem:[%s1469 + $0x30] sm:$0xf]
      %v1483 = vld [vmem:[%s1469 + $0x34] sm:$0xf]
      %v1484 = vld [vmem:[%s1469 + $0x38] sm:$0xf]
      %v1485 = vld [vmem:[%s1469 + $0x3c] sm:$0xf]
      %v1486 = vunpack.c.l.b16 %v1426
      %v1487 = vunpack.c.l.b16 %v1440
      %v1488 = vunpack.c.l.b16 %v1454
      %v1489 = vunpack.c.l.b16 %v1468
      %v1490 = vpack.c.b16 %v1487, %v1486
      %v1491 = vpack.c.b16 %v1489, %v1488
      %v1510 = vunpack.c.l.b16 %v1470
      %v1511 = vunpack.c.l.b16 %v1471
      %v1512 = vunpack.c.l.b16 %v1472
      %v1513 = vunpack.c.l.b16 %v1473
      %v1514 = vunpack.c.l.b16 %v1474
      %v1515 = vunpack.c.l.b16 %v1475
      %v1516 = vunpack.c.l.b16 %v1476
      %v1517 = vunpack.c.l.b16 %v1477
      %v1518 = vunpack.c.l.b16 %v1478
      %v1519 = vunpack.c.l.b16 %v1479
      %v1520 = vunpack.c.l.b16 %v1480
      %v1521 = vunpack.c.l.b16 %v1481
      %v1522 = vunpack.c.l.b16 %v1482
      %v1523 = vunpack.c.l.b16 %v1483
      %v1524 = vunpack.c.l.b16 %v1484
      %v1525 = vunpack.c.l.b16 %v1485
      %v1526 = vpack.c.b16 %v1511, %v1510
      %v1527 = vpack.c.b16 %v1513, %v1512
      %v1528 = vpack.c.b16 %v1515, %v1514
      %v1529 = vpack.c.b16 %v1517, %v1516
      %v1530 = vpack.c.b16 %v1519, %v1518
      %v1531 = vpack.c.b16 %v1521, %v1520
      %v1532 = vpack.c.b16 %v1523, %v1522
      %v1533 = vpack.c.b16 %v1525, %v1524
      %1542 = vmatprep.subr.bf16.mxu0 0
      %1543 = vmatpush1.bf16.msra.mxu0 %v1526
      %1544 = vmatprep.subr.bf16.mxu0 0
      %1545 = vmatpush1.bf16.msra.mxu0 %v1527
      %1546 = vmatprep.subr.bf16.mxu0 0
      %1547 = vmatpush1.bf16.msra.mxu0 %v1528
      %1548 = vmatprep.subr.bf16.mxu0 0
      %1549 = vmatpush1.bf16.msra.mxu0 %v1529
      %1550 = vmatprep.subr.bf16.mxu0 0
      %1551 = vmatpush1.bf16.msra.mxu0 %v1530
      %1552 = vmatprep.subr.bf16.mxu0 0
      %1553 = vmatpush1.bf16.msra.mxu0 %v1531
      %1554 = vmatprep.subr.bf16.mxu0 0
      %1555 = vmatpush1.bf16.msra.mxu0 %v1532
      %1556 = vmatprep.subr.bf16.mxu0 0
      %1557 = vmatpush1.bf16.msra.mxu0 %v1533
      %1558 = vmatprep.subr.bf16.mxu0 0
      %1559 = vmatpush1.bf16.msra.mxu0 0
      %1560 = vmatprep.subr.bf16.mxu0 0
      %1561 = vmatpush1.bf16.msra.mxu0 0
      %1562 = vmatprep.subr.bf16.mxu0 0
      %1563 = vmatpush1.bf16.msra.mxu0 0
      %1564 = vmatprep.subr.bf16.mxu0 0
      %1565 = vmatpush1.bf16.msra.mxu0 0
      %1566 = vmatprep.subr.bf16.mxu0 0
      %1567 = vmatpush1.bf16.msra.mxu0 0
      %1568 = vmatprep.subr.bf16.mxu0 0
      %1569 = vmatpush1.bf16.msra.mxu0 0
      %1570 = vmatprep.subr.bf16.mxu0 0
      %1571 = vmatpush1.bf16.msra.mxu0 0
      %1572 = vmatprep.subr.bf16.mxu0 0
      %1573 = vmatpush1.bf16.msra.mxu0 0
      %1574 = vmatprep.mubr.bf16.mxu0 0
      %1575 = vmatmul.mubr.bf16.gmra.mrb[0].mxu0 %v1490
      %v1576 = vpop.f32.mrb[0].mxu0
      %v1577 = vadd.f32 0.0, %v1576
      %v1578 = vpop.f32.mrb[0].mxu0
      %v1579 = vpop.f32.mrb[0].mxu0
      %v1580 = vadd.f32 0.0, %v1579
      %v1581 = vpop.f32.mrb[0].mxu0
      %1582 = vmatprep.mubr.bf16.mxu0 0
      %1583 = vmatmul.mubr.bf16.gmra.mrb[0].mxu0 %v1491
      %v1584 = vpop.f32.mrb[0].mxu0
      %v1585 = vadd.f32 0.0, %v1584
      %v1586 = vpop.f32.mrb[0].mxu0
      %v1587 = vpop.f32.mrb[0].mxu0
      %v1588 = vadd.f32 0.0, %v1587
      %v1589 = vpop.f32.mrb[0].mxu0
      %1590 = vdwg.mxu0
      %v1591 = vadd.f32 %v1397, %v1577
      %v1592 = vadd.f32 %v1398, %v1580
      %v1593 = vadd.f32 %v1399, %v1585
      %v1594 = vadd.f32 %v1400, %v1588
      %s1595 = scalar_lea.vmem %s2, 384
      %v1596 = vld [vmem:[%s1595] sm:$0xf]
      %v1597 = vld [vmem:[%s1595 + $0x4] sm:$0xf]
      %v1598 = vld [vmem:[%s1595 + $0x8] sm:$0xf]
      %v1599 = vld [vmem:[%s1595 + $0xc] sm:$0xf]
      %v1600 = vld [vmem:[%s1595 + $0x10] sm:$0xf]
      %v1601 = vld [vmem:[%s1595 + $0x14] sm:$0xf]
      %v1602 = vld [vmem:[%s1595 + $0x18] sm:$0xf]
      %v1603 = vld [vmem:[%s1595 + $0x1c] sm:$0xf]
      %v1604 = vld [vmem:[%s1595 + $0x20] sm:$0xf]
      %v1605 = vld [vmem:[%s1595 + $0x24] sm:$0xf]
      %v1606 = vld [vmem:[%s1595 + $0x28] sm:$0xf]
      %v1607 = vld [vmem:[%s1595 + $0x2c] sm:$0xf]
      %v1608 = vld [vmem:[%s1595 + $0x30] sm:$0xf]
      %v1609 = vld [vmem:[%s1595 + $0x34] sm:$0xf]
      %v1610 = vld [vmem:[%s1595 + $0x38] sm:$0xf]
      %v1611 = vld [vmem:[%s1595 + $0x3c] sm:$0xf]
      %v1613 = vunpack.c.l.b16 %v683
      %v1614 = vpack.c.b16 %v841, %v840
      %v1615 = vpack.c.b16 %v1613, %v842
      %v1634 = vunpack.c.l.b16 %v1596
      %v1635 = vunpack.c.l.b16 %v1597
      %v1636 = vunpack.c.l.b16 %v1598
      %v1637 = vunpack.c.l.b16 %v1599
      %v1638 = vunpack.c.l.b16 %v1600
      %v1639 = vunpack.c.l.b16 %v1601
      %v1640 = vunpack.c.l.b16 %v1602
      %v1641 = vunpack.c.l.b16 %v1603
      %v1642 = vunpack.c.l.b16 %v1604
      %v1643 = vunpack.c.l.b16 %v1605
      %v1644 = vunpack.c.l.b16 %v1606
      %v1645 = vunpack.c.l.b16 %v1607
      %v1646 = vunpack.c.l.b16 %v1608
      %v1647 = vunpack.c.l.b16 %v1609
      %v1648 = vunpack.c.l.b16 %v1610
      %v1649 = vunpack.c.l.b16 %v1611
      %v1650 = vpack.c.b16 %v1635, %v1634
      %v1651 = vpack.c.b16 %v1637, %v1636
      %v1652 = vpack.c.b16 %v1639, %v1638
      %v1653 = vpack.c.b16 %v1641, %v1640
      %v1654 = vpack.c.b16 %v1643, %v1642
      %v1655 = vpack.c.b16 %v1645, %v1644
      %v1656 = vpack.c.b16 %v1647, %v1646
      %v1657 = vpack.c.b16 %v1649, %v1648
      %1666 = vmatprep.subr.bf16.mxu0 0
      %1667 = vmatpush1.bf16.msra.mxu0 %v1650
      %1668 = vmatprep.subr.bf16.mxu0 0
      %1669 = vmatpush1.bf16.msra.mxu0 %v1651
      %1670 = vmatprep.subr.bf16.mxu0 0
      %1671 = vmatpush1.bf16.msra.mxu0 %v1652
      %1672 = vmatprep.subr.bf16.mxu0 0
      %1673 = vmatpush1.bf16.msra.mxu0 %v1653
      %1674 = vmatprep.subr.bf16.mxu0 0
      %1675 = vmatpush1.bf16.msra.mxu0 %v1654
      %1676 = vmatprep.subr.bf16.mxu0 0
      %1677 = vmatpush1.bf16.msra.mxu0 %v1655
      %1678 = vmatprep.subr.bf16.mxu0 0
      %1679 = vmatpush1.bf16.msra.mxu0 %v1656
      %1680 = vmatprep.subr.bf16.mxu0 0
      %1681 = vmatpush1.bf16.msra.mxu0 %v1657
      %1682 = vmatprep.subr.bf16.mxu0 0
      %1683 = vmatpush1.bf16.msra.mxu0 0
      %1684 = vmatprep.subr.bf16.mxu0 0
      %1685 = vmatpush1.bf16.msra.mxu0 0
      %1686 = vmatprep.subr.bf16.mxu0 0
      %1687 = vmatpush1.bf16.msra.mxu0 0
      %1688 = vmatprep.subr.bf16.mxu0 0
      %1689 = vmatpush1.bf16.msra.mxu0 0
      %1690 = vmatprep.subr.bf16.mxu0 0
      %1691 = vmatpush1.bf16.msra.mxu0 0
      %1692 = vmatprep.subr.bf16.mxu0 0
      %1693 = vmatpush1.bf16.msra.mxu0 0
      %1694 = vmatprep.subr.bf16.mxu0 0
      %1695 = vmatpush1.bf16.msra.mxu0 0
      %1696 = vmatprep.subr.bf16.mxu0 0
      %1697 = vmatpush1.bf16.msra.mxu0 0
      %1698 = vmatprep.mubr.bf16.mxu0 0
      %1699 = vmatmul.mubr.bf16.gmra.mrb[0].mxu0 %v1614
      %v1700 = vpop.f32.mrb[0].mxu0
      %v1701 = vadd.f32 0.0, %v1700
      %v1702 = vpop.f32.mrb[0].mxu0
      %v1703 = vpop.f32.mrb[0].mxu0
      %v1704 = vadd.f32 0.0, %v1703
      %v1705 = vpop.f32.mrb[0].mxu0
      %1706 = vmatprep.mubr.bf16.mxu0 0
      %1707 = vmatmul.mubr.bf16.gmra.mrb[0].mxu0 %v1615
      %v1708 = vpop.f32.mrb[0].mxu0
      %v1709 = vadd.f32 0.0, %v1708
      %v1710 = vpop.f32.mrb[0].mxu0
      %v1711 = vpop.f32.mrb[0].mxu0
      %v1712 = vadd.f32 0.0, %v1711
      %v1713 = vpop.f32.mrb[0].mxu0
      %1714 = vdwg.mxu0
      %v1715 = vadd.f32 %v1591, %v1701
      %v1716 = vadd.f32 %v1592, %v1704
      %v1717 = vadd.f32 %v1593, %v1709
      %v1718 = vadd.f32 %v1594, %v1712
      %s1719 = scalar_lea.vmem %s2, 448
      %v1720 = vld [vmem:[%s1719] sm:$0xf]
      %v1721 = vld [vmem:[%s1719 + $0x4] sm:$0xf]
      %v1722 = vld [vmem:[%s1719 + $0x8] sm:$0xf]
      %v1723 = vld [vmem:[%s1719 + $0xc] sm:$0xf]
      %v1724 = vld [vmem:[%s1719 + $0x10] sm:$0xf]
      %v1725 = vld [vmem:[%s1719 + $0x14] sm:$0xf]
      %v1726 = vld [vmem:[%s1719 + $0x18] sm:$0xf]
      %v1727 = vld [vmem:[%s1719 + $0x1c] sm:$0xf]
      %v1728 = vld [vmem:[%s1719 + $0x20] sm:$0xf]
      %v1729 = vld [vmem:[%s1719 + $0x24] sm:$0xf]
      %v1730 = vld [vmem:[%s1719 + $0x28] sm:$0xf]
      %v1731 = vld [vmem:[%s1719 + $0x2c] sm:$0xf]
      %v1732 = vld [vmem:[%s1719 + $0x30] sm:$0xf]
      %v1733 = vld [vmem:[%s1719 + $0x34] sm:$0xf]
      %v1734 = vld [vmem:[%s1719 + $0x38] sm:$0xf]
      %v1735 = vld [vmem:[%s1719 + $0x3c] sm:$0xf]
      %v1737 = vunpack.c.l.b16 %v684
      %v1738 = vpack.c.b16 %v732, %v731
      %v1739 = vpack.c.b16 %v1737, %v733
      %v1758 = vunpack.c.l.b16 %v1720
      %v1759 = vunpack.c.l.b16 %v1721
      %v1760 = vunpack.c.l.b16 %v1722
      %v1761 = vunpack.c.l.b16 %v1723
      %v1762 = vunpack.c.l.b16 %v1724
      %v1763 = vunpack.c.l.b16 %v1725
      %v1764 = vunpack.c.l.b16 %v1726
      %v1765 = vunpack.c.l.b16 %v1727
      %v1766 = vunpack.c.l.b16 %v1728
      %v1767 = vunpack.c.l.b16 %v1729
      %v1768 = vunpack.c.l.b16 %v1730
      %v1769 = vunpack.c.l.b16 %v1731
      %v1770 = vunpack.c.l.b16 %v1732
      %v1771 = vunpack.c.l.b16 %v1733
      %v1772 = vunpack.c.l.b16 %v1734
      %v1773 = vunpack.c.l.b16 %v1735
      %v1774 = vpack.c.b16 %v1759, %v1758
      %v1775 = vpack.c.b16 %v1761, %v1760
      %v1776 = vpack.c.b16 %v1763, %v1762
      %v1777 = vpack.c.b16 %v1765, %v1764
      %v1778 = vpack.c.b16 %v1767, %v1766
      %v1779 = vpack.c.b16 %v1769, %v1768
      %v1780 = vpack.c.b16 %v1771, %v1770
      %v1781 = vpack.c.b16 %v1773, %v1772
      %1790 = vmatprep.subr.bf16.mxu0 0
      %1791 = vmatpush1.bf16.msra.mxu0 %v1774
      %1792 = vmatprep.subr.bf16.mxu0 0
      %1793 = vmatpush1.bf16.msra.mxu0 %v1775
      %1794 = vmatprep.subr.bf16.mxu0 0
      %1795 = vmatpush1.bf16.msra.mxu0 %v1776
      %1796 = vmatprep.subr.bf16.mxu0 0
      %1797 = vmatpush1.bf16.msra.mxu0 %v1777
      %1798 = vmatprep.subr.bf16.mxu0 0
      %1799 = vmatpush1.bf16.msra.mxu0 %v1778
      %1800 = vmatprep.subr.bf16.mxu0 0
      %1801 = vmatpush1.bf16.msra.mxu0 %v1779
      %1802 = vmatprep.subr.bf16.mxu0 0
      %1803 = vmatpush1.bf16.msra.mxu0 %v1780
      %1804 = vmatprep.subr.bf16.mxu0 0
      %1805 = vmatpush1.bf16.msra.mxu0 %v1781
      %1806 = vmatprep.subr.bf16.mxu0 0
      %1807 = vmatpush1.bf16.msra.mxu0 0
      %1808 = vmatprep.subr.bf16.mxu0 0
      %1809 = vmatpush1.bf16.msra.mxu0 0
      %1810 = vmatprep.subr.bf16.mxu0 0
      %1811 = vmatpush1.bf16.msra.mxu0 0
      %1812 = vmatprep.subr.bf16.mxu0 0
      %1813 = vmatpush1.bf16.msra.mxu0 0
      %1814 = vmatprep.subr.bf16.mxu0 0
      %1815 = vmatpush1.bf16.msra.mxu0 0
      %1816 = vmatprep.subr.bf16.mxu0 0
      %1817 = vmatpush1.bf16.msra.mxu0 0
      %1818 = vmatprep.subr.bf16.mxu0 0
      %1819 = vmatpush1.bf16.msra.mxu0 0
      %1820 = vmatprep.subr.bf16.mxu0 0
      %1821 = vmatpush1.bf16.msra.mxu0 0
      %1822 = vmatprep.mubr.bf16.mxu0 0
      %1823 = vmatmul.mubr.bf16.gmra.mrb[0].mxu0 %v1738
      %v1824 = vpop.f32.mrb[0].mxu0
      %v1825 = vadd.f32 0.0, %v1824
      %v1826 = vpop.f32.mrb[0].mxu0
      %v1827 = vpop.f32.mrb[0].mxu0
      %v1828 = vadd.f32 0.0, %v1827
      %v1829 = vpop.f32.mrb[0].mxu0
      %1830 = vmatprep.mubr.bf16.mxu0 0
      %1831 = vmatmul.mubr.bf16.gmra.mrb[0].mxu0 %v1739
      %v1832 = vpop.f32.mrb[0].mxu0
      %v1833 = vadd.f32 0.0, %v1832
      %v1834 = vpop.f32.mrb[0].mxu0
      %v1835 = vpop.f32.mrb[0].mxu0
      %v1836 = vadd.f32 0.0, %v1835
      %v1837 = vpop.f32.mrb[0].mxu0
      %1838 = vdwg.mxu0
      %v1839 = vadd.f32 %v1715, %v1825
      %v1840 = vadd.f32 %v1716, %v1828
      %v1841 = vadd.f32 %v1717, %v1833
      %v1842 = vadd.f32 %v1718, %v1836
      %v1843 = vunpack.c.h.b16 %v683
      %v1844 = vpack.c.b16 %v1613, %v1613
      %v1845 = vpack.c.b16 %v1843, %v1843
      %v1847 = vshrl.u32 %v1844, 16
      %v1849 = vrot.slane %v1847, 4
      %v1850 = vshll.u32 %v1844, 16
      %v1852 = vrot.slane %v1850, 5
      %v1853 = vor.u32 %v1849, %v1852
      %v1854 = vrot.slane %v1853, 4
      %v1856 = vshll.u32 %v1845, 16
      %v1858 = vrot.slane %v1856, 5
      %v1859 = vsel %vm958, %v1854, %v1858
      %s1860 = scalar_lea.vmem %s2, 512
      %v1861 = vld [vmem:[%s1860] sm:$0xf]
      %v1862 = vld [vmem:[%s1860 + $0x4] sm:$0xf]
      %v1863 = vld [vmem:[%s1860 + $0x8] sm:$0xf]
      %v1864 = vld [vmem:[%s1860 + $0xc] sm:$0xf]
      %v1865 = vld [vmem:[%s1860 + $0x10] sm:$0xf]
      %v1866 = vld [vmem:[%s1860 + $0x14] sm:$0xf]
      %v1867 = vld [vmem:[%s1860 + $0x18] sm:$0xf]
      %v1868 = vld [vmem:[%s1860 + $0x1c] sm:$0xf]
      %v1869 = vld [vmem:[%s1860 + $0x20] sm:$0xf]
      %v1870 = vld [vmem:[%s1860 + $0x24] sm:$0xf]
      %v1871 = vld [vmem:[%s1860 + $0x28] sm:$0xf]
      %v1872 = vld [vmem:[%s1860 + $0x2c] sm:$0xf]
      %v1873 = vld [vmem:[%s1860 + $0x30] sm:$0xf]
      %v1874 = vld [vmem:[%s1860 + $0x34] sm:$0xf]
      %v1875 = vld [vmem:[%s1860 + $0x38] sm:$0xf]
      %v1876 = vld [vmem:[%s1860 + $0x3c] sm:$0xf]
      %v1877 = vunpack.c.l.b16 %v1859
      %v1878 = vpack.c.b16 %v1034, %v1033
      %v1879 = vpack.c.b16 %v1877, %v1035
      %v1898 = vunpack.c.l.b16 %v1861
      %v1899 = vunpack.c.l.b16 %v1862
      %v1900 = vunpack.c.l.b16 %v1863
      %v1901 = vunpack.c.l.b16 %v1864
      %v1902 = vunpack.c.l.b16 %v1865
      %v1903 = vunpack.c.l.b16 %v1866
      %v1904 = vunpack.c.l.b16 %v1867
      %v1905 = vunpack.c.l.b16 %v1868
      %v1906 = vunpack.c.l.b16 %v1869
      %v1907 = vunpack.c.l.b16 %v1870
      %v1908 = vunpack.c.l.b16 %v1871
      %v1909 = vunpack.c.l.b16 %v1872
      %v1910 = vunpack.c.l.b16 %v1873
      %v1911 = vunpack.c.l.b16 %v1874
      %v1912 = vunpack.c.l.b16 %v1875
      %v1913 = vunpack.c.l.b16 %v1876
      %v1914 = vpack.c.b16 %v1899, %v1898
      %v1915 = vpack.c.b16 %v1901, %v1900
      %v1916 = vpack.c.b16 %v1903, %v1902
      %v1917 = vpack.c.b16 %v1905, %v1904
      %v1918 = vpack.c.b16 %v1907, %v1906
      %v1919 = vpack.c.b16 %v1909, %v1908
      %v1920 = vpack.c.b16 %v1911, %v1910
      %v1921 = vpack.c.b16 %v1913, %v1912
      %1930 = vmatprep.subr.bf16.mxu0 0
      %1931 = vmatpush1.bf16.msra.mxu0 %v1914
      %1932 = vmatprep.subr.bf16.mxu0 0
      %1933 = vmatpush1.bf16.msra.mxu0 %v1915
      %1934 = vmatprep.subr.bf16.mxu0 0
      %1935 = vmatpush1.bf16.msra.mxu0 %v1916
      %1936 = vmatprep.subr.bf16.mxu0 0
      %1937 = vmatpush1.bf16.msra.mxu0 %v1917
      %1938 = vmatprep.subr.bf16.mxu0 0
      %1939 = vmatpush1.bf16.msra.mxu0 %v1918
      %1940 = vmatprep.subr.bf16.mxu0 0
      %1941 = vmatpush1.bf16.msra.mxu0 %v1919
      %1942 = vmatprep.subr.bf16.mxu0 0
      %1943 = vmatpush1.bf16.msra.mxu0 %v1920
      %1944 = vmatprep.subr.bf16.mxu0 0
      %1945 = vmatpush1.bf16.msra.mxu0 %v1921
      %1946 = vmatprep.subr.bf16.mxu0 0
      %1947 = vmatpush1.bf16.msra.mxu0 0
      %1948 = vmatprep.subr.bf16.mxu0 0
      %1949 = vmatpush1.bf16.msra.mxu0 0
      %1950 = vmatprep.subr.bf16.mxu0 0
      %1951 = vmatpush1.bf16.msra.mxu0 0
      %1952 = vmatprep.subr.bf16.mxu0 0
      %1953 = vmatpush1.bf16.msra.mxu0 0
      %1954 = vmatprep.subr.bf16.mxu0 0
      %1955 = vmatpush1.bf16.msra.mxu0 0
      %1956 = vmatprep.subr.bf16.mxu0 0
      %1957 = vmatpush1.bf16.msra.mxu0 0
      %1958 = vmatprep.subr.bf16.mxu0 0
      %1959 = vmatpush1.bf16.msra.mxu0 0
      %1960 = vmatprep.subr.bf16.mxu0 0
      %1961 = vmatpush1.bf16.msra.mxu0 0
      %1962 = vmatprep.mubr.bf16.mxu0 0
      %1963 = vmatmul.mubr.bf16.gmra.mrb[0].mxu0 %v1878
      %v1964 = vpop.f32.mrb[0].mxu0
      %v1965 = vadd.f32 0.0, %v1964
      %v1966 = vpop.f32.mrb[0].mxu0
      %v1967 = vpop.f32.mrb[0].mxu0
      %v1968 = vadd.f32 0.0, %v1967
      %v1969 = vpop.f32.mrb[0].mxu0
      %1970 = vmatprep.mubr.bf16.mxu0 0
      %1971 = vmatmul.mubr.bf16.gmra.mrb[0].mxu0 %v1879
      %v1972 = vpop.f32.mrb[0].mxu0
      %v1973 = vadd.f32 0.0, %v1972
      %v1974 = vpop.f32.mrb[0].mxu0
      %v1975 = vpop.f32.mrb[0].mxu0
      %v1976 = vadd.f32 0.0, %v1975
      %v1977 = vpop.f32.mrb[0].mxu0
      %1978 = vdwg.mxu0
      %v1979 = vadd.f32 %v1839, %v1965
      %v1980 = vadd.f32 %v1840, %v1968
      %v1981 = vadd.f32 %v1841, %v1973
      %v1982 = vadd.f32 %v1842, %v1976
      %v1983 = vld [vmem:[%s3] sm:$0x1]
      %v1985 = vlaneseq
      %v1986 = vshrl.u32 %v1985, 7
      %v1987 = vsub.s32 0, %v1986
      %v1988 = vrot.slane %v1983, %v1987
      %v1990 = vadd.f32 %v1979, %v1988
      %v1991 = vadd.f32 %v1980, %v1988
      %v1992 = vadd.f32 %v1981, %v1988
      %v1993 = vadd.f32 %v1982, %v1988
      %v1994 = vmax.f32 %v1990, 0.0
      %v1995 = vmax.f32 %v1991, 0.0
      %v1996 = vmax.f32 %v1992, 0.0
      %v1997 = vmax.f32 %v1993, 0.0
      %v1998 = vpack.c.bf16 %v1995, %v1994
      %v1999 = vpack.c.bf16 %v1997, %v1996
      %v2000 = vpack.c.b16 %v348, %v344
      %v2001 = vpack.c.b16 %v356, %v352
      %v2004 = vld [vmem:[%s4] sm:$0xf]
      %v2005 = vld [vmem:[%s4 + $0x4] sm:$0xf]
      %v2006 = vld [vmem:[%s4 + $0x8] sm:$0xf]
      %v2007 = vld [vmem:[%s4 + $0xc] sm:$0xf]
      %v2008 = vld [vmem:[%s4 + $0x10] sm:$0xf]
      %v2009 = vld [vmem:[%s4 + $0x14] sm:$0xf]
      %v2010 = vld [vmem:[%s4 + $0x18] sm:$0xf]
      %v2011 = vld [vmem:[%s4 + $0x1c] sm:$0xf]
      %v2012 = vld [vmem:[%s4 + $0x20] sm:$0xf]
      %v2013 = vld [vmem:[%s4 + $0x24] sm:$0xf]
      %v2014 = vld [vmem:[%s4 + $0x28] sm:$0xf]
      %v2015 = vld [vmem:[%s4 + $0x2c] sm:$0xf]
      %v2016 = vld [vmem:[%s4 + $0x30] sm:$0xf]
      %v2017 = vld [vmem:[%s4 + $0x34] sm:$0xf]
      %v2018 = vld [vmem:[%s4 + $0x38] sm:$0xf]
      %v2019 = vld [vmem:[%s4 + $0x3c] sm:$0xf]
      %v2020 = vld [vmem:[%s4 + $0x40] sm:$0xf]
      %v2021 = vld [vmem:[%s4 + $0x44] sm:$0xf]
      %v2022 = vld [vmem:[%s4 + $0x48] sm:$0xf]
      %v2023 = vld [vmem:[%s4 + $0x4c] sm:$0xf]
      %v2024 = vld [vmem:[%s4 + $0x50] sm:$0xf]
      %v2025 = vld [vmem:[%s4 + $0x54] sm:$0xf]
      %v2026 = vld [vmem:[%s4 + $0x58] sm:$0xf]
      %v2027 = vld [vmem:[%s4 + $0x5c] sm:$0xf]
      %v2028 = vld [vmem:[%s4 + $0x60] sm:$0xf]
      %v2029 = vld [vmem:[%s4 + $0x64] sm:$0xf]
      %v2030 = vld [vmem:[%s4 + $0x68] sm:$0xf]
      %v2031 = vld [vmem:[%s4 + $0x6c] sm:$0xf]
      %v2032 = vld [vmem:[%s4 + $0x70] sm:$0xf]
      %v2033 = vld [vmem:[%s4 + $0x74] sm:$0xf]
      %v2034 = vld [vmem:[%s4 + $0x78] sm:$0xf]
      %v2035 = vld [vmem:[%s4 + $0x7c] sm:$0xf]
      %v2068 = vunpack.c.l.b16 %v2004
      %v2069 = vunpack.c.l.b16 %v2005
      %v2070 = vunpack.c.l.b16 %v2006
      %v2071 = vunpack.c.l.b16 %v2007
      %v2072 = vunpack.c.l.b16 %v2008
      %v2073 = vunpack.c.l.b16 %v2009
      %v2074 = vunpack.c.l.b16 %v2010
      %v2075 = vunpack.c.l.b16 %v2011
      %v2076 = vunpack.c.l.b16 %v2012
      %v2077 = vunpack.c.l.b16 %v2013
      %v2078 = vunpack.c.l.b16 %v2014
      %v2079 = vunpack.c.l.b16 %v2015
      %v2080 = vunpack.c.l.b16 %v2016
      %v2081 = vunpack.c.l.b16 %v2017
      %v2082 = vunpack.c.l.b16 %v2018
      %v2083 = vunpack.c.l.b16 %v2019
      %v2084 = vunpack.c.l.b16 %v2020
      %v2085 = vunpack.c.l.b16 %v2021
      %v2086 = vunpack.c.l.b16 %v2022
      %v2087 = vunpack.c.l.b16 %v2023
      %v2088 = vunpack.c.l.b16 %v2024
      %v2089 = vunpack.c.l.b16 %v2025
      %v2090 = vunpack.c.l.b16 %v2026
      %v2091 = vunpack.c.l.b16 %v2027
      %v2092 = vunpack.c.l.b16 %v2028
      %v2093 = vunpack.c.l.b16 %v2029
      %v2094 = vunpack.c.l.b16 %v2030
      %v2095 = vunpack.c.l.b16 %v2031
      %v2096 = vunpack.c.l.b16 %v2032
      %v2097 = vunpack.c.l.b16 %v2033
      %v2098 = vunpack.c.l.b16 %v2034
      %v2099 = vunpack.c.l.b16 %v2035
      %v2100 = vpack.c.b16 %v2069, %v2068
      %v2101 = vpack.c.b16 %v2071, %v2070
      %v2102 = vpack.c.b16 %v2073, %v2072
      %v2103 = vpack.c.b16 %v2075, %v2074
      %v2104 = vpack.c.b16 %v2077, %v2076
      %v2105 = vpack.c.b16 %v2079, %v2078
      %v2106 = vpack.c.b16 %v2081, %v2080
      %v2107 = vpack.c.b16 %v2083, %v2082
      %v2108 = vpack.c.b16 %v2085, %v2084
      %v2109 = vpack.c.b16 %v2087, %v2086
      %v2110 = vpack.c.b16 %v2089, %v2088
      %v2111 = vpack.c.b16 %v2091, %v2090
      %v2112 = vpack.c.b16 %v2093, %v2092
      %v2113 = vpack.c.b16 %v2095, %v2094
      %v2114 = vpack.c.b16 %v2097, %v2096
      %v2115 = vpack.c.b16 %v2099, %v2098
      %2132 = vmatprep.subr.bf16.mxu0 0
      %2133 = vmatpush1.bf16.msra.mxu0 %v2100
      %2134 = vmatprep.subr.bf16.mxu0 0
      %2135 = vmatpush1.bf16.msra.mxu0 %v2101
      %2136 = vmatprep.subr.bf16.mxu0 0
      %2137 = vmatpush1.bf16.msra.mxu0 %v2102
      %2138 = vmatprep.subr.bf16.mxu0 0
      %2139 = vmatpush1.bf16.msra.mxu0 %v2103
      %2140 = vmatprep.subr.bf16.mxu0 0
      %2141 = vmatpush1.bf16.msra.mxu0 %v2104
      %2142 = vmatprep.subr.bf16.mxu0 0
      %2143 = vmatpush1.bf16.msra.mxu0 %v2105
      %2144 = vmatprep.subr.bf16.mxu0 0
      %2145 = vmatpush1.bf16.msra.mxu0 %v2106
      %2146 = vmatprep.subr.bf16.mxu0 0
      %2147 = vmatpush1.bf16.msra.mxu0 %v2107
      %2148 = vmatprep.subr.bf16.mxu0 0
      %2149 = vmatpush1.bf16.msra.mxu0 %v2108
      %2150 = vmatprep.subr.bf16.mxu0 0
      %2151 = vmatpush1.bf16.msra.mxu0 %v2109
      %2152 = vmatprep.subr.bf16.mxu0 0
      %2153 = vmatpush1.bf16.msra.mxu0 %v2110
      %2154 = vmatprep.subr.bf16.mxu0 0
      %2155 = vmatpush1.bf16.msra.mxu0 %v2111
      %2156 = vmatprep.subr.bf16.mxu0 0
      %2157 = vmatpush1.bf16.msra.mxu0 %v2112
      %2158 = vmatprep.subr.bf16.mxu0 0
      %2159 = vmatpush1.bf16.msra.mxu0 %v2113
      %2160 = vmatprep.subr.bf16.mxu0 0
      %2161 = vmatpush1.bf16.msra.mxu0 %v2114
      %2162 = vmatprep.subr.bf16.mxu0 0
      %2163 = vmatpush1.bf16.msra.mxu0 %v2115
      %2164 = vmatprep.mubr.bf16.mxu0 %v2000
      %2165 = vmatmul.mubr.bf16.gmra.mrb[0].mxu0 %v1998
      %v2166 = vpop.f32.mrb[0].mxu0
      %v2167 = vadd.f32 0.0, %v2166
      %v2168 = vpop.f32.mrb[0].mxu0
      %v2169 = vpop.f32.mrb[0].mxu0
      %v2170 = vadd.f32 0.0, %v2169
      %v2171 = vpop.f32.mrb[0].mxu0
      %2172 = vmatprep.mubr.bf16.mxu0 %v2001
      %2173 = vmatmul.mubr.bf16.gmra.mrb[0].mxu0 %v1999
      %v2174 = vpop.f32.mrb[0].mxu0
      %v2175 = vadd.f32 0.0, %v2174
      %v2176 = vpop.f32.mrb[0].mxu0
      %v2177 = vpop.f32.mrb[0].mxu0
      %v2178 = vadd.f32 0.0, %v2177
      %v2179 = vpop.f32.mrb[0].mxu0
      %2180 = vdwg.mxu0
      %v2181 = vmax.f32 %v2167, 0.0
      %v2182 = vmax.f32 %v2170, 0.0
      %v2183 = vmax.f32 %v2175, 0.0
      %v2184 = vmax.f32 %v2178, 0.0
      %2185 = vst [vmem:[%s224] sm:$0xff] %v2181
      %2186 = vst [vmem:[%s224 + $0x8] sm:$0xff] %v2182
      %2187 = vst [vmem:[%s224 + $0x10] sm:$0xff] %v2183
      %2188 = vst [vmem:[%s224 + $0x18] sm:$0xff] %v2184
      %p2189 = scmp.lt.s32.totalorder %s16, 3
      %s2190 = scalar_select %p2189, %s16, 3
      %s2191 = smul.addr %s2190, 4
      %s2192 = smul.addr %s2191, 8
      %s2193 = scalar_lea.vmem %s5, %s2192
      // Predicated region
      $region41: #{_lambda_.1} parent=39 // pred_check
        %p2194 = pneg %p144
      $region42: #{_lambda_.1} parent=39 // pred_check_branch
        %2196 = sbr.rel (%p2194) target = $region44
      $region43: #{_lambda_.1} parent=39 // pred_region
        _
      $region44: #{_lambda_.1} parent=39 // pred_fallthru
        _
    $region40: #{_lambda_.1} parent=5 // pred_fallthru
      _
    %p2197 = scmp.le.s32.totalorder 2, %s11
    // Predicated region
    $region45: #{_lambda_.1} parent=5 // pred_check
      %p2198 = pneg %p2197
    $region46: #{_lambda_.1} parent=5 // pred_check_branch
      %2200 = sbr.rel (%p2198) target = $region48
    $region47: #{_lambda_.1} parent=5 // pred_region
      %s2201 = ssub.s32 %s11, 2
      // Predicated region
      $region49: #{_lambda_.1} parent=47 // pred_check
        %p2202 = pneg %p150
      $region50: #{_lambda_.1} parent=47 // pred_check_branch
        %2204 = sbr.rel (%p2202) target = $region52
      $region51: #{_lambda_.1} parent=47 // pred_region
        %p2205 = scmp.lt.s32.totalorder %s17, 3
        %s2206 = scalar_select %p2205, %s17, 3
        %s2207 = smul.addr %s2206, 4
        %s2208 = smul.addr %s2207, 8
        %s2209 = scalar_lea.vmem %s5, %s2208
      $region52: #{_lambda_.1} parent=47 // pred_fallthru
        _
    $region48: #{_lambda_.1} parent=5 // pred_fallthru
      _
  $region6: #{_lambda_.1} parent=0 // loop_footer
    %s15 = sadd.s32 1, %s11
  $region7: #{_lambda_.1} parent=0 // loop_footer_branch
    %10 = sbr.rel target = $region3
  $region8: #{_lambda_.1} parent=0 // loop_exit
    _

</llo_original>
